<compile_context>
chip_gen: v5e
topology: v5e:2x2
jax: 0.10.0
libtpu: 0.0.40
codegen_flags: <defaults>
</compile_context>

<pallas_src>
import math

import jax
import jax.numpy as jnp
from jax.experimental import pallas as pl
from jax.experimental.pallas import tpu as pltpu


_LOG2 = math.log(2.0)                        # BCEWithLogits value when the hard "logit" is 0
_BCE_ONE = 1.0 + math.log1p(math.exp(-1.0))  # when the hard "logit" is 1: value = _BCE_ONE - target


def _shift(a, amount, axis, use_roll):
    """Array whose element [i] along `axis` holds a[i - amount].
    Edge elements are wrapped (roll) or zero (concat fallback); in both cases
    the caller masks them out, so the two paths are interchangeable."""
    if use_roll:
        size = a.shape[axis]
        return pltpu.roll(a, amount % size, axis)   # XLU rotate, no VMEM temp
    R, W = a.shape
    if axis == 0:
        z = jnp.zeros((1, W), a.dtype)
        if amount == 1:
            return jnp.concatenate([z, a[:R - 1, :]], axis=0)
        return jnp.concatenate([a[1:, :], z], axis=0)
    z = jnp.zeros((R, 1), a.dtype)
    if amount == 1:
        return jnp.concatenate([z, a[:, :W - 1]], axis=1)
    return jnp.concatenate([a[:, 1:], z], axis=1)


def _make_kernel(H, TB, W, row_roll, col_roll):
    R = TB * H  # rows per block: TB whole images stacked along the sublane axis

    def kernel(pred_ref, tgt_ref, out_ref):
        x = pred_ref[...].astype(jnp.float32)   # (R, W) raw logits
        t = tgt_ref[...].astype(jnp.float32)    # (R, W) targets

        # ---- mask loss: BCEWithLogits, elementwise over the full tile --------
        # max(x,0) - x*t + log(1 + exp(-|x|)); exp(-|x|) in (0,1] -> safe.
        mask_elt = jnp.maximum(x, 0.0) - x * t + jnp.log(1.0 + jnp.exp(-jnp.abs(x)))
        mask_sum = jnp.sum(mask_elt)

        # ---- boundary loss: 3x3 box sum == conv2d(ones(1,1,3,3), padding=1) --
        # Narrow edge masks: (R,1) for per-image top/bottom rows (also kills the
        # rolled wrap-around row), (1,W) for the image's first/last column.
        row_in_img = jax.lax.broadcasted_iota(jnp.int32, (R, 1), 0) % H
        top_row = row_in_img == 0
        bot_row = row_in_img == (H - 1)
        lane = jax.lax.broadcasted_iota(jnp.int32, (1, W), 1)
        first_col = lane == 0
        last_col = lane == (W - 1)

        def box3x3(a):
            # Separable 3x3 box sum: vertical 3-row sum then horizontal 3-col sum.
            up = _shift(a, 1, 0, row_roll)     # a[i-1, :]
            dn = _shift(a, -1, 0, row_roll)    # a[i+1, :]
            vs = (a
                  + jnp.where(top_row, 0.0, up)
                  + jnp.where(bot_row, 0.0, dn))
            lf = _shift(vs, 1, 1, col_roll)    # vs[:, j-1]
            rt = _shift(vs, -1, 1, col_roll)   # vs[:, j+1]
            return (vs
                    + jnp.where(first_col, 0.0, lf)
                    + jnp.where(last_col, 0.0, rt))

        b_pred = box3x3(x) < 9.0
        b_tgt = (box3x3(t) < 9.0).astype(jnp.float32)
        # BCEWithLogits applied to hard {0,1} logits collapses to a 2-way select:
        #   logit==0 -> log(2);  logit==1 -> 1 - target + log1p(e^-1)
        bnd_elt = jnp.where(b_pred, _BCE_ONE - b_tgt, _LOG2)
        boundary_sum = jnp.sum(bnd_elt)

        # ---- per-block partial sums into one lane-dense (1,1,128) tile -------
        out_lane = jax.lax.broadcasted_iota(jnp.int32, (1, 1, 128), 2)
        out_ref[...] = jnp.where(out_lane == 0, mask_sum,
                                 jnp.where(out_lane == 1, boundary_sum, 0.0))

    return kernel


def _vmem_budget():
    """(per-input block budget in f32 bytes, scoped vmem_limit_bytes), sized per chip."""
    try:
        kind = jax.devices()[0].device_kind.lower()
    except Exception:
        kind = ""
    if "v5 lite" in kind or "v5e" in kind or "v6" in kind:
        # v5e / v6e: 128 MiB physical VMEM -> bigger blocks, higher scoped limit.
        return 6 * 1024 * 1024, 80 * 1024 * 1024
    # v7x (64 MiB physical) and unknown chips: conservative so temps + 2x2 buffers fit.
    return 2 * 1024 * 1024, 32 * 1024 * 1024


def _choose_tb(N, H, W, in_itemsize, block_budget):
    """Images per grid step: largest divisor of N such that
       * the block fits the per-input f32 VMEM budget (kernel upcasts to f32),
       * the sublane dim (tb*H) is a multiple of the dtype packing factor,
       * grid_n stays >= 4 (else >= 2) so double-buffering overlaps DMA with
         compute and v7x's two TensorCores both get blocks."""
    sub_mult = {4: 8, 2: 16, 1: 32}.get(in_itemsize, 8)
    per_img_f32 = max(1, H * W * 4)
    cap_budget = max(1, block_budget // per_img_f32)
    for min_grid in (4, 2, 1):
        cap = min(N, cap_budget, max(1, N // min_grid))
        for tb in range(cap, 0, -1):
            if N % tb == 0 and (tb * H) % sub_mult == 0:
                return tb
    # TODO(synk): for awkward H / one huge image, tile along H with a 1-row halo
    # instead of a whole-array block (which may not fit v7x's 64 MiB VMEM).
    return N


def _run(p2d, t2d, H, tb, W, grid_n, vmem_limit, use_roll):
    rows = tb * H
    row_roll = use_roll and (rows % 8 == 0)
    col_roll = use_roll and (W % 128 == 0)
    return pl.pallas_call(
        _make_kernel(H, tb, W, row_roll, col_roll),
        out_shape=jax.ShapeDtypeStruct((grid_n, 1, 128), jnp.float32),
        grid_spec=pltpu.PrefetchScalarGridSpec(
            num_scalar_prefetch=0,
            grid=(grid_n,),
            in_specs=[
                pl.BlockSpec((rows, W), lambda i: (i, 0)),
                pl.BlockSpec((rows, W), lambda i: (i, 0)),
            ],
            out_specs=pl.BlockSpec((1, 1, 128), lambda i: (i, 0, 0)),
        ),
        compiler_params=pltpu.CompilerParams(
            dimension_semantics=("parallel",),   # independent blocks -> megacore OK
            vmem_limit_bytes=vmem_limit,
        ),
    )(p2d, t2d)


def combined_mask_loss(pred, target, mask_loss_weight=1.0, boundary_loss_weight=1.0):
    """pred, target: (N, 1, H, W) arrays (NCHW; C must be 1, as in the PyTorch module)."""
    N, C, H, W = pred.shape
    assert C == 1, "BoundaryLoss conv weight (1,1,3,3) requires a single channel"

    # Free row-major reshapes -- no HBM copy, no dtype change, W stays the lane dim.
    p2d = pred.reshape(N * H, W)
    t2d = target.reshape(N * H, W)

    block_budget, vmem_limit = _vmem_budget()
    tb = _choose_tb(N, H, W, jnp.dtype(pred.dtype).itemsize, block_budget)
    grid_n = N // tb

    try:
        partials = _run(p2d, t2d, H, tb, W, grid_n, vmem_limit, use_roll=True)
    except Exception:
        # Safety net: fall back to concat-based shifts if roll fails to lower.
        partials = _run(p2d, t2d, H, tb, W, grid_n, vmem_limit, use_roll=False)

    mask_sum = jnp.sum(partials[:, 0, 0])
    boundary_sum = jnp.sum(partials[:, 0, 1])

    n_elems = jnp.float32(N * H * W)          # C == 1
    mask_loss = mask_sum / n_elems            # mean reduction
    boundary_loss = boundary_sum / n_elems    # mean reduction, alpha = 1.0
    return mask_loss_weight * mask_loss + boundary_loss_weight * boundary_loss


def _reference_loss(pred, target, mask_loss_weight=1.0, boundary_loss_weight=1.0):
    """Pure-JAX reference mirroring the PyTorch module."""
    pred = pred.astype(jnp.float32)
    target = target.astype(jnp.float32)

    def bce(x, t):
        return jnp.mean(jnp.maximum(x, 0.0) - x * t
                        + jnp.log(1.0 + jnp.exp(-jnp.abs(x))))

    mask_loss = bce(pred, target)

    def box(a):
        ap = jnp.pad(a, ((0, 0), (0, 0), (1, 1), (1, 1)))
        H, W = a.shape[2], a.shape[3]
        s = jnp.zeros_like(a)
        for di in range(3):
            for dj in range(3):
                s = s + ap[:, :, di:di + H, dj:dj + W]
        return s

    bp = (box(pred) < 9.0).astype(jnp.float32)
    bt = (box(target) < 9.0).astype(jnp.float32)
    boundary_loss = bce(bp, bt)
    return mask_loss_weight * mask_loss + boundary_loss_weight * boundary_loss


if __name__ == "__main__":
    key = jax.random.PRNGKey(0)
    k1, k2 = jax.random.split(key)

    N, C, H, W = 4, 1, 32, 128
    pred = jax.random.normal(k1, (N, C, H, W), dtype=jnp.float32)
    target = jax.random.bernoulli(k2, 0.5, (N, C, H, W)).astype(jnp.float32)

    out = combined_mask_loss(pred, target)
    out = jax.block_until_ready(out)

    ref = _reference_loss(pred, target)
    assert jnp.allclose(out, ref, rtol=1e-4, atol=1e-5), (out, ref)

    print("KERNEL_OK")
</pallas_src>

<mosaic_0001>
module attributes {stable_mosaic.version = 11 : i64} {
  func.func @kernel(%arg0: i32, %arg1: memref<32x128xf32, #tpu.memory_space<vmem>>, %arg2: memref<32x128xf32, #tpu.memory_space<vmem>>, %arg3: memref<1x1x128xf32, #tpu.memory_space<vmem>>) attributes {dimension_semantics = [#tpu.dimension_semantics<parallel>], iteration_bounds = array<i64: 4>, scalar_prefetch = 0 : i64, scratch_operands = 0 : i64, tpu.core_type = #tpu.core_type<tc>, window_params = [{transform_indices = @transform_0, window_bounds = array<i64: 32, 128>}, {transform_indices = @transform_1, window_bounds = array<i64: 32, 128>}, {transform_indices = @transform_2, window_bounds = array<i64: 1, 1, 128>}]} {
    %c0 = arith.constant 0 : index
    %c0_0 = arith.constant 0 : index
    %0 = vector.load %arg1[%c0, %c0_0] : memref<32x128xf32, #tpu.memory_space<vmem>>, vector<32x128xf32>
    %c0_1 = arith.constant 0 : index
    %c0_2 = arith.constant 0 : index
    %1 = vector.load %arg2[%c0_1, %c0_2] : memref<32x128xf32, #tpu.memory_space<vmem>>, vector<32x128xf32>
    %cst = arith.constant 0.000000e+00 : f32
    %2 = vector.broadcast %cst : f32 to vector<32x128xf32>
    %3 = arith.maximumf %0, %2 : vector<32x128xf32>
    %4 = arith.mulf %0, %1 : vector<32x128xf32>
    %5 = arith.subf %3, %4 : vector<32x128xf32>
    %6 = math.absf %0 : vector<32x128xf32>
    %cst_3 = arith.constant 0.000000e+00 : f32
    %7 = vector.broadcast %cst_3 : f32 to vector<32x128xf32>
    %8 = arith.subf %7, %6 : vector<32x128xf32>
    %9 = math.exp %8 : vector<32x128xf32>
    %cst_4 = arith.constant 1.000000e+00 : f32
    %10 = vector.broadcast %cst_4 : f32 to vector<32x128xf32>
    %11 = arith.addf %10, %9 : vector<32x128xf32>
    %12 = math.log %11 : vector<32x128xf32>
    %13 = arith.addf %5, %12 : vector<32x128xf32>
    %14 = vector.shape_cast %13 : vector<32x128xf32> to vector<1x32x128xf32>
    %cst_5 = arith.constant dense<0.000000e+00> : vector<1xf32>
    %15 = vector.multi_reduction <add>, %14, %cst_5 [1, 2] : vector<1x32x128xf32> to vector<1xf32>
    %16 = vector.shape_cast %15 : vector<1xf32> to vector<1x1x1xf32>
    %17 = vector.extract %16[0, 0, 0] : f32 from vector<1x1x1xf32>
    %18 = tpu.iota {dimensions = array<i32: 0>} : vector<32x1xi32>
    %c32_i32 = arith.constant 32 : i32
    %c0_i32 = arith.constant 0 : i32
    %19 = arith.cmpi eq, %c32_i32, %c0_i32 : i32
    %c1_i32 = arith.constant 1 : i32
    %20 = arith.select %19, %c1_i32, %c32_i32 : i32
    %21 = vector.broadcast %20 : i32 to vector<32x1xi32>
    %22 = arith.remsi %18, %21 : vector<32x1xi32>
    %c0_i32_6 = arith.constant 0 : i32
    %23 = vector.broadcast %c0_i32_6 : i32 to vector<32x1xi32>
    %24 = arith.cmpi ne, %22, %23 : vector<32x1xi32>
    %c0_i32_7 = arith.constant 0 : i32
    %25 = vector.broadcast %c0_i32_7 : i32 to vector<32x1xi32>
    %26 = arith.cmpi slt, %22, %25 : vector<32x1xi32>
    %c0_i32_8 = arith.constant 0 : i32
    %27 = arith.cmpi slt, %20, %c0_i32_8 : i32
    %28 = vector.broadcast %27 : i1 to vector<32x1xi1>
    %29 = vector.broadcast %28 : vector<32x1xi1> to vector<32x1xi1>
    %30 = arith.xori %26, %29 : vector<32x1xi1>
    %31 = arith.andi %30, %24 : vector<32x1xi1>
    %32 = vector.broadcast %20 : i32 to vector<32x1xi32>
    %33 = arith.addi %22, %32 : vector<32x1xi32>
    %34 = arith.select %31, %33, %22 : vector<32x1xi1>, vector<32x1xi32>
    %c0_i32_9 = arith.constant 0 : i32
    %35 = vector.broadcast %c0_i32_9 : i32 to vector<32x1xi32>
    %36 = arith.cmpi eq, %34, %35 : vector<32x1xi32>
    %c31_i32 = arith.constant 31 : i32
    %37 = vector.broadcast %c31_i32 : i32 to vector<32x1xi32>
    %38 = arith.cmpi eq, %34, %37 : vector<32x1xi32>
    %39 = tpu.iota {dimensions = array<i32: 1>} : vector<1x128xi32>
    %c0_i32_10 = arith.constant 0 : i32
    %40 = vector.broadcast %c0_i32_10 : i32 to vector<1x128xi32>
    %41 = arith.cmpi eq, %39, %40 : vector<1x128xi32>
    %c127_i32 = arith.constant 127 : i32
    %42 = vector.broadcast %c127_i32 : i32 to vector<1x128xi32>
    %43 = arith.cmpi eq, %39, %42 : vector<1x128xi32>
    %c1_i32_11 = arith.constant 1 : i32
    %44 = tpu.dynamic_rotate %0 by %c1_i32_11 dim 0 : vector<32x128xf32>, i32 -> vector<32x128xf32>
    %c31_i32_12 = arith.constant 31 : i32
    %45 = tpu.dynamic_rotate %0 by %c31_i32_12 dim 0 : vector<32x128xf32>, i32 -> vector<32x128xf32>
    %cst_13 = arith.constant 0.000000e+00 : f32
    %46 = vector.shape_cast %36 : vector<32x1xi1> to vector<32x1xi1>
    %47 = vector.broadcast %46 : vector<32x1xi1> to vector<32x128xi1>
    %48 = vector.broadcast %cst_13 : f32 to vector<32x128xf32>
    %49 = arith.select %47, %48, %44 : vector<32x128xi1>, vector<32x128xf32>
    %50 = arith.addf %0, %49 : vector<32x128xf32>
    %cst_14 = arith.constant 0.000000e+00 : f32
    %51 = vector.shape_cast %38 : vector<32x1xi1> to vector<32x1xi1>
    %52 = vector.broadcast %51 : vector<32x1xi1> to vector<32x128xi1>
    %53 = vector.broadcast %cst_14 : f32 to vector<32x128xf32>
    %54 = arith.select %52, %53, %45 : vector<32x128xi1>, vector<32x128xf32>
    %55 = arith.addf %50, %54 : vector<32x128xf32>
    %c1_i32_15 = arith.constant 1 : i32
    %56 = tpu.dynamic_rotate %55 by %c1_i32_15 dim 1 : vector<32x128xf32>, i32 -> vector<32x128xf32>
    %c127_i32_16 = arith.constant 127 : i32
    %57 = tpu.dynamic_rotate %55 by %c127_i32_16 dim 1 : vector<32x128xf32>, i32 -> vector<32x128xf32>
    %cst_17 = arith.constant 0.000000e+00 : f32
    %58 = vector.shape_cast %41 : vector<1x128xi1> to vector<1x128xi1>
    %59 = vector.broadcast %58 : vector<1x128xi1> to vector<32x128xi1>
    %60 = vector.broadcast %cst_17 : f32 to vector<32x128xf32>
    %61 = arith.select %59, %60, %56 : vector<32x128xi1>, vector<32x128xf32>
    %62 = arith.addf %55, %61 : vector<32x128xf32>
    %cst_18 = arith.constant 0.000000e+00 : f32
    %63 = vector.shape_cast %43 : vector<1x128xi1> to vector<1x128xi1>
    %64 = vector.broadcast %63 : vector<1x128xi1> to vector<32x128xi1>
    %65 = vector.broadcast %cst_18 : f32 to vector<32x128xf32>
    %66 = arith.select %64, %65, %57 : vector<32x128xi1>, vector<32x128xf32>
    %67 = arith.addf %62, %66 : vector<32x128xf32>
    %cst_19 = arith.constant 9.000000e+00 : f32
    %68 = vector.broadcast %cst_19 : f32 to vector<32x128xf32>
    %69 = arith.cmpf olt, %67, %68 : vector<32x128xf32>
    %c1_i32_20 = arith.constant 1 : i32
    %70 = tpu.dynamic_rotate %1 by %c1_i32_20 dim 0 : vector<32x128xf32>, i32 -> vector<32x128xf32>
    %c31_i32_21 = arith.constant 31 : i32
    %71 = tpu.dynamic_rotate %1 by %c31_i32_21 dim 0 : vector<32x128xf32>, i32 -> vector<32x128xf32>
    %cst_22 = arith.constant 0.000000e+00 : f32
    %72 = vector.shape_cast %36 : vector<32x1xi1> to vector<32x1xi1>
    %73 = vector.broadcast %72 : vector<32x1xi1> to vector<32x128xi1>
    %74 = vector.broadcast %cst_22 : f32 to vector<32x128xf32>
    %75 = arith.select %73, %74, %70 : vector<32x128xi1>, vector<32x128xf32>
    %76 = arith.addf %1, %75 : vector<32x128xf32>
    %cst_23 = arith.constant 0.000000e+00 : f32
    %77 = vector.shape_cast %38 : vector<32x1xi1> to vector<32x1xi1>
    %78 = vector.broadcast %77 : vector<32x1xi1> to vector<32x128xi1>
    %79 = vector.broadcast %cst_23 : f32 to vector<32x128xf32>
    %80 = arith.select %78, %79, %71 : vector<32x128xi1>, vector<32x128xf32>
    %81 = arith.addf %76, %80 : vector<32x128xf32>
    %c1_i32_24 = arith.constant 1 : i32
    %82 = tpu.dynamic_rotate %81 by %c1_i32_24 dim 1 : vector<32x128xf32>, i32 -> vector<32x128xf32>
    %c127_i32_25 = arith.constant 127 : i32
    %83 = tpu.dynamic_rotate %81 by %c127_i32_25 dim 1 : vector<32x128xf32>, i32 -> vector<32x128xf32>
    %cst_26 = arith.constant 0.000000e+00 : f32
    %84 = vector.shape_cast %41 : vector<1x128xi1> to vector<1x128xi1>
    %85 = vector.broadcast %84 : vector<1x128xi1> to vector<32x128xi1>
    %86 = vector.broadcast %cst_26 : f32 to vector<32x128xf32>
    %87 = arith.select %85, %86, %82 : vector<32x128xi1>, vector<32x128xf32>
    %88 = arith.addf %81, %87 : vector<32x128xf32>
    %cst_27 = arith.constant 0.000000e+00 : f32
    %89 = vector.shape_cast %43 : vector<1x128xi1> to vector<1x128xi1>
    %90 = vector.broadcast %89 : vector<1x128xi1> to vector<32x128xi1>
    %91 = vector.broadcast %cst_27 : f32 to vector<32x128xf32>
    %92 = arith.select %90, %91, %83 : vector<32x128xi1>, vector<32x128xf32>
    %93 = arith.addf %88, %92 : vector<32x128xf32>
    %cst_28 = arith.constant 9.000000e+00 : f32
    %94 = vector.broadcast %cst_28 : f32 to vector<32x128xf32>
    %95 = arith.cmpf olt, %93, %94 : vector<32x128xf32>
    %96 = arith.extui %95 : vector<32x128xi1> to vector<32x128xi32>
    %97 = arith.sitofp %96 : vector<32x128xi32> to vector<32x128xf32>
    %cst_29 = arith.constant 1.31326163 : f32
    %98 = vector.broadcast %cst_29 : f32 to vector<32x128xf32>
    %99 = arith.subf %98, %97 : vector<32x128xf32>
    %cst_30 = arith.constant 0.693147182 : f32
    %100 = vector.broadcast %cst_30 : f32 to vector<32x128xf32>
    %101 = arith.select %69, %99, %100 : vector<32x128xi1>, vector<32x128xf32>
    %102 = vector.shape_cast %101 : vector<32x128xf32> to vector<1x32x128xf32>
    %cst_31 = arith.constant dense<0.000000e+00> : vector<1xf32>
    %103 = vector.multi_reduction <add>, %102, %cst_31 [1, 2] : vector<1x32x128xf32> to vector<1xf32>
    %104 = vector.shape_cast %103 : vector<1xf32> to vector<1x1x1xf32>
    %105 = vector.extract %104[0, 0, 0] : f32 from vector<1x1x1xf32>
    %106 = tpu.iota {dimensions = array<i32: 2>} : vector<1x1x128xi32>
    %c0_i32_32 = arith.constant 0 : i32
    %107 = vector.broadcast %c0_i32_32 : i32 to vector<1x1x128xi32>
    %108 = arith.cmpi eq, %106, %107 : vector<1x1x128xi32>
    %c1_i32_33 = arith.constant 1 : i32
    %109 = vector.broadcast %c1_i32_33 : i32 to vector<1x1x128xi32>
    %110 = arith.cmpi eq, %106, %109 : vector<1x1x128xi32>
    %cst_34 = arith.constant 0.000000e+00 : f32
    %111 = vector.broadcast %105 : f32 to vector<1x1x128xf32>
    %112 = vector.broadcast %cst_34 : f32 to vector<1x1x128xf32>
    %113 = arith.select %110, %111, %112 : vector<1x1x128xi1>, vector<1x1x128xf32>
    %114 = vector.broadcast %17 : f32 to vector<1x1x128xf32>
    %115 = arith.select %108, %114, %113 : vector<1x1x128xi1>, vector<1x1x128xf32>
    %c0_35 = arith.constant 0 : index
    %c0_36 = arith.constant 0 : index
    %c0_37 = arith.constant 0 : index
    %116 = vector.load %arg3[%c0_35, %c0_36, %c0_37] : memref<1x1x128xf32, #tpu.memory_space<vmem>>, vector<1x1x128xf32>
    tpu.vector_store %arg3[%c0_35, %c0_36, %c0_37], %115 {strides = array<i32>} : memref<1x1x128xf32, #tpu.memory_space<vmem>>, vector<1x1x128xf32>,
    return
  }
  func.func @transform_0(%arg0: i32) -> (i32, i32) {
    %c0_i32 = arith.constant 0 : i32
    %c0_i32_0 = arith.constant 0 : i32
    return %arg0, %c0_i32 : i32, i32
  }
  func.func @transform_1(%arg0: i32) -> (i32, i32) {
    %c0_i32 = arith.constant 0 : i32
    %c0_i32_0 = arith.constant 0 : i32
    return %arg0, %c0_i32 : i32, i32
  }
  func.func @transform_2(%arg0: i32) -> (i32, i32, i32) {
    %c0_i32 = arith.constant 0 : i32
    %c0_i32_0 = arith.constant 0 : i32
    %c0_i32_1 = arith.constant 0 : i32
    return %arg0, %c0_i32, %c0_i32_0 : i32, i32, i32
  }
}

module attributes {stable_mosaic.version = 11 : i64} {
  func.func @kernel(%arg0: i32, %arg1: memref<32x128xf32, #tpu.memory_space<vmem>>, %arg2: memref<32x128xf32, #tpu.memory_space<vmem>>, %arg3: memref<1x1x128xf32, #tpu.memory_space<vmem>>) attributes {dimension_semantics = [#tpu.dimension_semantics<parallel>], iteration_bounds = array<i64: 4>, scalar_prefetch = 0 : i64, scratch_operands = 0 : i64, tpu.core_type = #tpu.core_type<tc>, window_params = [{transform_indices = @transform_0, window_bounds = array<i64: 32, 128>}, {transform_indices = @transform_1, window_bounds = array<i64: 32, 128>}, {transform_indices = @transform_2, window_bounds = array<i64: 1, 1, 128>}]} {
    %c0 = arith.constant 0 : index
    %c0_0 = arith.constant 0 : index
    %0 = vector.load %arg1[%c0, %c0_0] : memref<32x128xf32, #tpu.memory_space<vmem>>, vector<32x128xf32>
    %c0_1 = arith.constant 0 : index
    %c0_2 = arith.constant 0 : index
    %1 = vector.load %arg2[%c0_1, %c0_2] : memref<32x128xf32, #tpu.memory_space<vmem>>, vector<32x128xf32>
    %cst = arith.constant 0.000000e+00 : f32
    %2 = vector.broadcast %cst : f32 to vector<32x128xf32>
    %3 = arith.maximumf %0, %2 : vector<32x128xf32>
    %4 = arith.mulf %0, %1 : vector<32x128xf32>
    %5 = arith.subf %3, %4 : vector<32x128xf32>
    %6 = math.absf %0 : vector<32x128xf32>
    %cst_3 = arith.constant 0.000000e+00 : f32
    %7 = vector.broadcast %cst_3 : f32 to vector<32x128xf32>
    %8 = arith.subf %7, %6 : vector<32x128xf32>
    %9 = math.exp %8 : vector<32x128xf32>
    %cst_4 = arith.constant 1.000000e+00 : f32
    %10 = vector.broadcast %cst_4 : f32 to vector<32x128xf32>
    %11 = arith.addf %10, %9 : vector<32x128xf32>
    %12 = math.log %11 : vector<32x128xf32>
    %13 = arith.addf %5, %12 : vector<32x128xf32>
    %14 = vector.shape_cast %13 : vector<32x128xf32> to vector<1x32x128xf32>
    %cst_5 = arith.constant dense<0.000000e+00> : vector<1xf32>
    %15 = vector.multi_reduction <add>, %14, %cst_5 [1, 2] : vector<1x32x128xf32> to vector<1xf32>
    %16 = vector.shape_cast %15 : vector<1xf32> to vector<1x1x1xf32>
    %17 = vector.extract %16[0, 0, 0] : f32 from vector<1x1x1xf32>
    %18 = tpu.iota {dimensions = array<i32: 0>} : vector<32x1xi32>
    %c32_i32 = arith.constant 32 : i32
    %c0_i32 = arith.constant 0 : i32
    %19 = arith.cmpi eq, %c32_i32, %c0_i32 : i32
    %c1_i32 = arith.constant 1 : i32
    %20 = arith.select %19, %c1_i32, %c32_i32 : i32
    %21 = vector.broadcast %20 : i32 to vector<32x1xi32>
    %22 = arith.remsi %18, %21 : vector<32x1xi32>
    %c0_i32_6 = arith.constant 0 : i32
    %23 = vector.broadcast %c0_i32_6 : i32 to vector<32x1xi32>
    %24 = arith.cmpi ne, %22, %23 : vector<32x1xi32>
    %c0_i32_7 = arith.constant 0 : i32
    %25 = vector.broadcast %c0_i32_7 : i32 to vector<32x1xi32>
    %26 = arith.cmpi slt, %22, %25 : vector<32x1xi32>
    %c0_i32_8 = arith.constant 0 : i32
    %27 = arith.cmpi slt, %20, %c0_i32_8 : i32
    %28 = vector.broadcast %27 : i1 to vector<32x1xi1>
    %29 = vector.broadcast %28 : vector<32x1xi1> to vector<32x1xi1>
    %30 = arith.xori %26, %29 : vector<32x1xi1>
    %31 = arith.andi %30, %24 : vector<32x1xi1>
    %32 = vector.broadcast %20 : i32 to vector<32x1xi32>
    %33 = arith.addi %22, %32 : vector<32x1xi32>
    %34 = arith.select %31, %33, %22 : vector<32x1xi1>, vector<32x1xi32>
    %c0_i32_9 = arith.constant 0 : i32
    %35 = vector.broadcast %c0_i32_9 : i32 to vector<32x1xi32>
    %36 = arith.cmpi eq, %34, %35 : vector<32x1xi32>
    %c31_i32 = arith.constant 31 : i32
    %37 = vector.broadcast %c31_i32 : i32 to vector<32x1xi32>
    %38 = arith.cmpi eq, %34, %37 : vector<32x1xi32>
    %39 = tpu.iota {dimensions = array<i32: 1>} : vector<1x128xi32>
    %c0_i32_10 = arith.constant 0 : i32
    %40 = vector.broadcast %c0_i32_10 : i32 to vector<1x128xi32>
    %41 = arith.cmpi eq, %39, %40 : vector<1x128xi32>
    %c127_i32 = arith.constant 127 : i32
    %42 = vector.broadcast %c127_i32 : i32 to vector<1x128xi32>
    %43 = arith.cmpi eq, %39, %42 : vector<1x128xi32>
    %cst_11 = arith.constant 0.000000e+00 : f32
    %44 = vector.broadcast %cst_11 : f32 to vector<1x128xf32>
    %45 = vector.extract_strided_slice %0 {offsets = [0, 0], sizes = [31, 128], strides = [1, 1]} : vector<32x128xf32> to vector<31x128xf32>
    %46 = tpu.concatenate %44, %45 in 0 : vector<1x128xf32>, vector<31x128xf32> -> vector<32x128xf32>
    %cst_12 = arith.constant 0.000000e+00 : f32
    %47 = vector.broadcast %cst_12 : f32 to vector<1x128xf32>
    %48 = vector.extract_strided_slice %0 {offsets = [1, 0], sizes = [31, 128], strides = [1, 1]} : vector<32x128xf32> to vector<31x128xf32>
    %49 = tpu.concatenate %48, %47 in 0 : vector<31x128xf32>, vector<1x128xf32> -> vector<32x128xf32>
    %cst_13 = arith.constant 0.000000e+00 : f32
    %50 = vector.shape_cast %36 : vector<32x1xi1> to vector<32x1xi1>
    %51 = vector.broadcast %50 : vector<32x1xi1> to vector<32x128xi1>
    %52 = vector.broadcast %cst_13 : f32 to vector<32x128xf32>
    %53 = arith.select %51, %52, %46 : vector<32x128xi1>, vector<32x128xf32>
    %54 = arith.addf %0, %53 : vector<32x128xf32>
    %cst_14 = arith.constant 0.000000e+00 : f32
    %55 = vector.shape_cast %38 : vector<32x1xi1> to vector<32x1xi1>
    %56 = vector.broadcast %55 : vector<32x1xi1> to vector<32x128xi1>
    %57 = vector.broadcast %cst_14 : f32 to vector<32x128xf32>
    %58 = arith.select %56, %57, %49 : vector<32x128xi1>, vector<32x128xf32>
    %59 = arith.addf %54, %58 : vector<32x128xf32>
    %cst_15 = arith.constant 0.000000e+00 : f32
    %60 = vector.broadcast %cst_15 : f32 to vector<32x1xf32>
    %61 = vector.extract_strided_slice %59 {offsets = [0, 0], sizes = [32, 127], strides = [1, 1]} : vector<32x128xf32> to vector<32x127xf32>
    %62 = tpu.concatenate %60, %61 in 1 : vector<32x1xf32>, vector<32x127xf32> -> vector<32x128xf32>
    %cst_16 = arith.constant 0.000000e+00 : f32
    %63 = vector.broadcast %cst_16 : f32 to vector<32x1xf32>
    %64 = vector.extract_strided_slice %59 {offsets = [0, 1], sizes = [32, 127], strides = [1, 1]} : vector<32x128xf32> to vector<32x127xf32>
    %65 = tpu.concatenate %64, %63 in 1 : vector<32x127xf32>, vector<32x1xf32> -> vector<32x128xf32>
    %cst_17 = arith.constant 0.000000e+00 : f32
    %66 = vector.shape_cast %41 : vector<1x128xi1> to vector<1x128xi1>
    %67 = vector.broadcast %66 : vector<1x128xi1> to vector<32x128xi1>
    %68 = vector.broadcast %cst_17 : f32 to vector<32x128xf32>
    %69 = arith.select %67, %68, %62 : vector<32x128xi1>, vector<32x128xf32>
    %70 = arith.addf %59, %69 : vector<32x128xf32>
    %cst_18 = arith.constant 0.000000e+00 : f32
    %71 = vector.shape_cast %43 : vector<1x128xi1> to vector<1x128xi1>
    %72 = vector.broadcast %71 : vector<1x128xi1> to vector<32x128xi1>
    %73 = vector.broadcast %cst_18 : f32 to vector<32x128xf32>
    %74 = arith.select %72, %73, %65 : vector<32x128xi1>, vector<32x128xf32>
    %75 = arith.addf %70, %74 : vector<32x128xf32>
    %cst_19 = arith.constant 9.000000e+00 : f32
    %76 = vector.broadcast %cst_19 : f32 to vector<32x128xf32>
    %77 = arith.cmpf olt, %75, %76 : vector<32x128xf32>
    %cst_20 = arith.constant 0.000000e+00 : f32
    %78 = vector.broadcast %cst_20 : f32 to vector<1x128xf32>
    %79 = vector.extract_strided_slice %1 {offsets = [0, 0], sizes = [31, 128], strides = [1, 1]} : vector<32x128xf32> to vector<31x128xf32>
    %80 = tpu.concatenate %78, %79 in 0 : vector<1x128xf32>, vector<31x128xf32> -> vector<32x128xf32>
    %cst_21 = arith.constant 0.000000e+00 : f32
    %81 = vector.broadcast %cst_21 : f32 to vector<1x128xf32>
    %82 = vector.extract_strided_slice %1 {offsets = [1, 0], sizes = [31, 128], strides = [1, 1]} : vector<32x128xf32> to vector<31x128xf32>
    %83 = tpu.concatenate %82, %81 in 0 : vector<31x128xf32>, vector<1x128xf32> -> vector<32x128xf32>
    %cst_22 = arith.constant 0.000000e+00 : f32
    %84 = vector.shape_cast %36 : vector<32x1xi1> to vector<32x1xi1>
    %85 = vector.broadcast %84 : vector<32x1xi1> to vector<32x128xi1>
    %86 = vector.broadcast %cst_22 : f32 to vector<32x128xf32>
    %87 = arith.select %85, %86, %80 : vector<32x128xi1>, vector<32x128xf32>
    %88 = arith.addf %1, %87 : vector<32x128xf32>
    %cst_23 = arith.constant 0.000000e+00 : f32
    %89 = vector.shape_cast %38 : vector<32x1xi1> to vector<32x1xi1>
    %90 = vector.broadcast %89 : vector<32x1xi1> to vector<32x128xi1>
    %91 = vector.broadcast %cst_23 : f32 to vector<32x128xf32>
    %92 = arith.select %90, %91, %83 : vector<32x128xi1>, vector<32x128xf32>
    %93 = arith.addf %88, %92 : vector<32x128xf32>
    %cst_24 = arith.constant 0.000000e+00 : f32
    %94 = vector.broadcast %cst_24 : f32 to vector<32x1xf32>
    %95 = vector.extract_strided_slice %93 {offsets = [0, 0], sizes = [32, 127], strides = [1, 1]} : vector<32x128xf32> to vector<32x127xf32>
    %96 = tpu.concatenate %94, %95 in 1 : vector<32x1xf32>, vector<32x127xf32> -> vector<32x128xf32>
    %cst_25 = arith.constant 0.000000e+00 : f32
    %97 = vector.broadcast %cst_25 : f32 to vector<32x1xf32>
    %98 = vector.extract_strided_slice %93 {offsets = [0, 1], sizes = [32, 127], strides = [1, 1]} : vector<32x128xf32> to vector<32x127xf32>
    %99 = tpu.concatenate %98, %97 in 1 : vector<32x127xf32>, vector<32x1xf32> -> vector<32x128xf32>
    %cst_26 = arith.constant 0.000000e+00 : f32
    %100 = vector.shape_cast %41 : vector<1x128xi1> to vector<1x128xi1>
    %101 = vector.broadcast %100 : vector<1x128xi1> to vector<32x128xi1>
    %102 = vector.broadcast %cst_26 : f32 to vector<32x128xf32>
    %103 = arith.select %101, %102, %96 : vector<32x128xi1>, vector<32x128xf32>
    %104 = arith.addf %93, %103 : vector<32x128xf32>
    %cst_27 = arith.constant 0.000000e+00 : f32
    %105 = vector.shape_cast %43 : vector<1x128xi1> to vector<1x128xi1>
    %106 = vector.broadcast %105 : vector<1x128xi1> to vector<32x128xi1>
    %107 = vector.broadcast %cst_27 : f32 to vector<32x128xf32>
    %108 = arith.select %106, %107, %99 : vector<32x128xi1>, vector<32x128xf32>
    %109 = arith.addf %104, %108 : vector<32x128xf32>
    %cst_28 = arith.constant 9.000000e+00 : f32
    %110 = vector.broadcast %cst_28 : f32 to vector<32x128xf32>
    %111 = arith.cmpf olt, %109, %110 : vector<32x128xf32>
    %112 = arith.extui %111 : vector<32x128xi1> to vector<32x128xi32>
    %113 = arith.sitofp %112 : vector<32x128xi32> to vector<32x128xf32>
    %cst_29 = arith.constant 1.31326163 : f32
    %114 = vector.broadcast %cst_29 : f32 to vector<32x128xf32>
    %115 = arith.subf %114, %113 : vector<32x128xf32>
    %cst_30 = arith.constant 0.693147182 : f32
    %116 = vector.broadcast %cst_30 : f32 to vector<32x128xf32>
    %117 = arith.select %77, %115, %116 : vector<32x128xi1>, vector<32x128xf32>
    %118 = vector.shape_cast %117 : vector<32x128xf32> to vector<1x32x128xf32>
    %cst_31 = arith.constant dense<0.000000e+00> : vector<1xf32>
    %119 = vector.multi_reduction <add>, %118, %cst_31 [1, 2] : vector<1x32x128xf32> to vector<1xf32>
    %120 = vector.shape_cast %119 : vector<1xf32> to vector<1x1x1xf32>
    %121 = vector.extract %120[0, 0, 0] : f32 from vector<1x1x1xf32>
    %122 = tpu.iota {dimensions = array<i32: 2>} : vector<1x1x128xi32>
    %c0_i32_32 = arith.constant 0 : i32
    %123 = vector.broadcast %c0_i32_32 : i32 to vector<1x1x128xi32>
    %124 = arith.cmpi eq, %122, %123 : vector<1x1x128xi32>
    %c1_i32_33 = arith.constant 1 : i32
    %125 = vector.broadcast %c1_i32_33 : i32 to vector<1x1x128xi32>
    %126 = arith.cmpi eq, %122, %125 : vector<1x1x128xi32>
    %cst_34 = arith.constant 0.000000e+00 : f32
    %127 = vector.broadcast %121 : f32 to vector<1x1x128xf32>
    %128 = vector.broadcast %cst_34 : f32 to vector<1x1x128xf32>
    %129 = arith.select %126, %127, %128 : vector<1x1x128xi1>, vector<1x1x128xf32>
    %130 = vector.broadcast %17 : f32 to vector<1x1x128xf32>
    %131 = arith.select %124, %130, %129 : vector<1x1x128xi1>, vector<1x1x128xf32>
    %c0_35 = arith.constant 0 : index
    %c0_36 = arith.constant 0 : index
    %c0_37 = arith.constant 0 : index
    %132 = vector.load %arg3[%c0_35, %c0_36, %c0_37] : memref<1x1x128xf32, #tpu.memory_space<vmem>>, vector<1x1x128xf32>
    tpu.vector_store %arg3[%c0_35, %c0_36, %c0_37], %131 {strides = array<i32>} : memref<1x1x128xf32, #tpu.memory_space<vmem>>, vector<1x1x128xf32>,
    return
  }
  func.func @transform_0(%arg0: i32) -> (i32, i32) {
    %c0_i32 = arith.constant 0 : i32
    %c0_i32_0 = arith.constant 0 : i32
    return %arg0, %c0_i32 : i32, i32
  }
  func.func @transform_1(%arg0: i32) -> (i32, i32) {
    %c0_i32 = arith.constant 0 : i32
    %c0_i32_0 = arith.constant 0 : i32
    return %arg0, %c0_i32 : i32, i32
  }
  func.func @transform_2(%arg0: i32) -> (i32, i32, i32) {
    %c0_i32 = arith.constant 0 : i32
    %c0_i32_0 = arith.constant 0 : i32
    %c0_i32_1 = arith.constant 0 : i32
    return %arg0, %c0_i32, %c0_i32_0 : i32, i32, i32
  }
}

</mosaic_0001>

<llo_original>
// kernel: tpu_custom_call.1
$region0: #{tpu_custom_call.1}
  #allocation0 [shape = 'u32[]', space=smem, size = 0x4, offset = 0x4, fixed_abs, tag = 'smem constant byte address 0x4 - core index']
  #allocation1 [shape = 'u32[72,128]{1,0:T(1,128)}', space=vmem, size = 0x9000, scoped, tag = 'internal scratch']
  %s0 = inlined_call_operand.hbm [shape: f32[128,128], index: 0, kind: input, shape index: {}]
  %s1 = inlined_call_operand.hbm [shape: f32[128,128], index: 1, kind: input, shape index: {}]
  %s2 = inlined_call_operand.hbm [shape: f32[4,1,128], index: 2, kind: output, shape index: {}]
  %s3 = sld [smem:[#allocation0]]
  $region49: #{tpu_custom_call.1} parent=0
    _
  %s5 = ssub.s32 1, %s3
  %s6 = scalar_select 0, %s5, %s3
  $region1: #{tpu_custom_call.1} parent=0
    #allocation2 [shape = 'u8[32768]{0}', space=vmem, size = 0x8000, scoped, tag = 'input window, operand 0']
    #allocation3 [shape = 's32[2]{0}', space=sflag, size = 0x8, scoped, tag = 'scoped memory for tpu_custom_call.1']
    #allocation4 [shape = 's32[2]{0}', space=sflag, size = 0x8, scoped, tag = 'scoped memory for tpu_custom_call.1']
    #allocation5 [shape = 'u8[32768]{0}', space=vmem, size = 0x8000, scoped, tag = 'input window, operand 1']
    #allocation6 [shape = 's32[2]{0}', space=sflag, size = 0x8, scoped, tag = 'scoped memory for tpu_custom_call.1']
    #allocation7 [shape = 'u8[1024]{0}', space=vmem, size = 0x400, scoped, tag = 'output window, operand 0']
    %7 = vsyncpa [#allocation3], 0
    %s8 = scalar_lea.sflag [#allocation3], 1
    %9 = vsyncpa %s8, 0
    %10 = vsyncpa [#allocation6], 0
    %s11 = scalar_lea.sflag [#allocation6], 1
    %12 = vsyncpa %s11, 0
    %13 = vsyncpa [#allocation4], 0
    %s14 = scalar_lea.sflag [#allocation4], 1
    %15 = vsyncpa %s14, 0
    loop: start=0, step=1, limit=6
    $region2: #{tpu_custom_call.1} parent=1 // loop_pre_header
      _
    $region3: #{tpu_custom_call.1} parent=1 // loop_header
      %s17 = sphi 0, %s21
      %p18 = scmp.ge.s32.totalorder %s17, 6
      %s27 = sphi 0, %s29
      %s30 = sphi 0, %s27
      %s31 = sphi 0, %s30
      %s47 = sphi 0, %s31
      %s53 = sphi 0, %s55
      %s56 = sphi 0, %s53
      %s57 = sphi 0, %s56
      %s73 = sphi 0, %s57
      %s79 = sphi 0, %s81
      %s82 = sphi 0, %s79
      %s83 = sphi 0, %s82
      %s99 = sphi 0, %s83
    $region4: #{tpu_custom_call.1} parent=1 // loop_header_branch
      %20 = sbr.rel (%p18) target = $region8
    $region5: #{tpu_custom_call.1} parent=1 // loop_body
      %s22 = ssub.s32 %s17, 1
      %s23 = ssub.s32 %s17, 2
      %s24 = sadd.s32 %s17, 1
      %s25 = ssub.s32 %s17, %s24
      %p26 = scmp.eq.s32.totalorder %s25, 0
      %s28 = sadd.s32 %s27, 1
      %s29 = scalar_select %p26, %s27, %s28
      %p32 = pneg %p26
      %p33 = scmp.eq.s32.totalorder %s17, 3
      %p34 = por %p32, %p33
      %p35 = scmp.ne.s32.totalorder %s27, %s30
      %p36 = scmp.eq.s32.totalorder %s17, 0
      %p37 = por %p35, %p36
      %p38 = scmp.ne.s32.totalorder %s27, %s30
      %p39 = scmp.eq.s32.totalorder %s22, 3
      %p40 = por %p38, %p39
      %p41 = scmp.ne.s32.totalorder %s30, %s31
      %p42 = scmp.eq.s32.totalorder %s22, 0
      %p43 = por %p41, %p42
      %p44 = scmp.ne.s32.totalorder %s30, %s31
      %p45 = scmp.eq.s32.totalorder %s23, 3
      %p46 = por %p44, %p45
      %p48 = scmp.ne.s32.totalorder %s31, %s47
      %p49 = scmp.eq.s32.totalorder %s23, 0
      %p50 = por %p48, %p49
      %s51 = ssub.s32 %s17, %s24
      %p52 = scmp.eq.s32.totalorder %s51, 0
      %s54 = sadd.s32 %s53, 1
      %s55 = scalar_select %p52, %s53, %s54
      %p58 = pneg %p52
      %p59 = scmp.eq.s32.totalorder %s17, 3
      %p60 = por %p58, %p59
      %p61 = scmp.ne.s32.totalorder %s53, %s56
      %p62 = scmp.eq.s32.totalorder %s17, 0
      %p63 = por %p61, %p62
      %p64 = scmp.ne.s32.totalorder %s53, %s56
      %p65 = scmp.eq.s32.totalorder %s22, 3
      %p66 = por %p64, %p65
      %p67 = scmp.ne.s32.totalorder %s56, %s57
      %p68 = scmp.eq.s32.totalorder %s22, 0
      %p69 = por %p67, %p68
      %p70 = scmp.ne.s32.totalorder %s56, %s57
      %p71 = scmp.eq.s32.totalorder %s23, 3
      %p72 = por %p70, %p71
      %p74 = scmp.ne.s32.totalorder %s57, %s73
      %p75 = scmp.eq.s32.totalorder %s23, 0
      %p76 = por %p74, %p75
      %s77 = ssub.s32 %s17, %s24
      %p78 = scmp.eq.s32.totalorder %s77, 0
      %s80 = sadd.s32 %s79, 1
      %s81 = scalar_select %p78, %s79, %s80
      %p84 = pneg %p78
      %p85 = scmp.eq.s32.totalorder %s17, 3
      %p86 = por %p84, %p85
      %p87 = scmp.ne.s32.totalorder %s79, %s82
      %p88 = scmp.eq.s32.totalorder %s17, 0
      %p89 = por %p87, %p88
      %p90 = scmp.ne.s32.totalorder %s79, %s82
      %p91 = scmp.eq.s32.totalorder %s22, 3
      %p92 = por %p90, %p91
      %p93 = scmp.ne.s32.totalorder %s82, %s83
      %p94 = scmp.eq.s32.totalorder %s22, 0
      %p95 = por %p93, %p94
      %p96 = scmp.ne.s32.totalorder %s82, %s83
      %p97 = scmp.eq.s32.totalorder %s23, 3
      %p98 = por %p96, %p97
      %p100 = scmp.ne.s32.totalorder %s83, %s99
      %p101 = scmp.eq.s32.totalorder %s23, 0
      %p102 = por %p100, %p101
      %p103 = scmp.le.s32.totalorder 1, %s17
      %p104 = scmp.lt.s32.totalorder %s17, 5
      %p105 = pnand %p103, %p104
      %p106 = pneg %p105
      // Predicated region
      $region9: #{tpu_custom_call.1} parent=5 // pred_check
        _
      $region10: #{tpu_custom_call.1} parent=5 // pred_check_branch
        %108 = sbr.rel (%p105) target = $region12
      $region11: #{tpu_custom_call.1} parent=5 // pred_region
        %s109 = ssub.s32 %s17, 1
      $region12: #{tpu_custom_call.1} parent=5 // pred_fallthru
        _
      %p110 = scmp.lt.s32.totalorder %s17, 4
      // Predicated region
      $region13: #{tpu_custom_call.1} parent=5 // pred_check
        %p111 = pneg %p110
      $region14: #{tpu_custom_call.1} parent=5 // pred_check_branch
        %113 = sbr.rel (%p111) target = $region16
      $region15: #{tpu_custom_call.1} parent=5 // pred_region
        // Predicated region
        $region17: #{tpu_custom_call.1} parent=15 // pred_check
          %p114 = pneg %p37
        $region18: #{tpu_custom_call.1} parent=15 // pred_check_branch
          %116 = sbr.rel (%p114) target = $region20
        $region19: #{tpu_custom_call.1} parent=15 // pred_region
          %s117 = sand.u32 %s27, 1
          %s118 = scalar_lea.sflag [#allocation3], %s117
          %s119 = sand.u32 %s27, 1
          %s120 = smul.addr %s119, 32
          %s121 = scalar_lea.vmem [#allocation2], %s120
          %s122 = smul.u32 4, %s17
          %124 = vsyncadd %s118, 0
          %s125 = smul.addr %s122, 8
          %s126 = scalar_lea.hbm %s0, %s125
          %s127 = sshll.u32 %s126, 4
          %s128 = int_to_ptr.hbm [resolvable:$true] %s127
          %s129 = sshll.u32 %s121, 4
          %s130 = int_to_ptr.vmem [resolvable:$true] %s129
          %135 = dma.hbm_to_vmem [thread:$0]  %s128, 512, %s130, %s118, 128, 128, 8
        $region20: #{tpu_custom_call.1} parent=15 // pred_fallthru
          _
        // Predicated region
        $region21: #{tpu_custom_call.1} parent=15 // pred_check
          %p136 = pneg %p63
        $region22: #{tpu_custom_call.1} parent=15 // pred_check_branch
          %138 = sbr.rel (%p136) target = $region24
        $region23: #{tpu_custom_call.1} parent=15 // pred_region
          %s139 = sand.u32 %s53, 1
          %s140 = scalar_lea.sflag [#allocation6], %s139
          %s141 = sand.u32 %s53, 1
          %s142 = smul.addr %s141, 32
          %s143 = scalar_lea.vmem [#allocation5], %s142
          %s144 = smul.u32 4, %s17
          %146 = vsyncadd %s140, 0
          %s147 = smul.addr %s144, 8
          %s148 = scalar_lea.hbm %s1, %s147
          %s149 = sshll.u32 %s148, 4
          %s150 = int_to_ptr.hbm [resolvable:$true] %s149
          %s151 = sshll.u32 %s143, 4
          %s152 = int_to_ptr.vmem [resolvable:$true] %s151
          %157 = dma.hbm_to_vmem [thread:$0]  %s150, 512, %s152, %s140, 128, 128, 8
        $region24: #{tpu_custom_call.1} parent=15 // pred_fallthru
          _
      $region16: #{tpu_custom_call.1} parent=5 // pred_fallthru
        _
      %p158 = scmp.le.s32.totalorder 1, %s17
      %p159 = scmp.lt.s32.totalorder %s17, 5
      %p160 = pnand %p158, %p159
      %p161 = pneg %p160
      // Predicated region
      $region25: #{tpu_custom_call.1} parent=5 // pred_check
        _
      $region26: #{tpu_custom_call.1} parent=5 // pred_check_branch
        %163 = sbr.rel (%p160) target = $region28
      $region27: #{tpu_custom_call.1} parent=5 // pred_region
        %s164 = ssub.s32 %s17, 1
        %s165 = sand.u32 %s30, 1
        %s166 = scalar_lea.sflag [#allocation3], %s165
        %s167 = sand.u32 %s30, 1
        %s168 = smul.addr %s167, 32
        %s169 = scalar_lea.vmem [#allocation2], %s168
        // Predicated region
        $region29: #{tpu_custom_call.1} parent=27 // pred_check
          %p170 = pneg %p43
        $region30: #{tpu_custom_call.1} parent=27 // pred_check_branch
          %172 = sbr.rel (%p170) target = $region32
        $region31: #{tpu_custom_call.1} parent=27 // pred_region
          %174 = dma.done %s166, 512
        $region32: #{tpu_custom_call.1} parent=27 // pred_fallthru
          _
        %s175 = sand.u32 %s56, 1
        %s176 = scalar_lea.sflag [#allocation6], %s175
        %s177 = sand.u32 %s56, 1
        %s178 = smul.addr %s177, 32
        %s179 = scalar_lea.vmem [#allocation5], %s178
        // Predicated region
        $region33: #{tpu_custom_call.1} parent=27 // pred_check
          %p180 = pneg %p69
        $region34: #{tpu_custom_call.1} parent=27 // pred_check_branch
          %182 = sbr.rel (%p180) target = $region36
        $region35: #{tpu_custom_call.1} parent=27 // pred_region
          %184 = dma.done %s176, 512
        $region36: #{tpu_custom_call.1} parent=27 // pred_fallthru
          _
        %s185 = sand.u32 %s30, 1
        %s186 = scalar_lea.sflag [#allocation3], %s185
        %s187 = sand.u32 %s30, 1
        %s188 = smul.addr %s187, 32
        %s189 = scalar_lea.vmem [#allocation2], %s188
        %p190 = pneg %p43
        %p191 = pneg %p40
        %s192 = sand.u32 %s56, 1
        %s193 = scalar_lea.sflag [#allocation6], %s192
        %s194 = sand.u32 %s56, 1
        %s195 = smul.addr %s194, 32
        %s196 = scalar_lea.vmem [#allocation5], %s195
        %p197 = pneg %p69
        %p198 = pneg %p66
        %p199 = pneg %p95
        %p200 = pneg %p92
        %s201 = sand.u32 %s82, 1
        %s202 = scalar_lea.sflag [#allocation4], %s201
        %s203 = sand.u32 %s82, 1
        %s204 = scalar_lea.vmem [#allocation7], %s203
        %s205 = smul.u32 4, %s22
        %s206 = smul.u32 4, %s22
        %v207 = vld [vmem:[%s169] sm:$0xff]
        %v208 = vld [vmem:[%s169 + $0x8] sm:$0xff]
        %v209 = vld [vmem:[%s169 + $0x10] sm:$0xff]
        %v210 = vld [vmem:[%s169 + $0x18] sm:$0xff]
        %v211 = vld [vmem:[%s179] sm:$0xff]
        %v212 = vld [vmem:[%s179 + $0x8] sm:$0xff]
        %v213 = vld [vmem:[%s179 + $0x10] sm:$0xff]
        %v214 = vld [vmem:[%s179 + $0x18] sm:$0xff]
        %v215 = vmax.f32 %v207, 0.0
        %v216 = vmax.f32 %v208, 0.0
        %v217 = vmax.f32 %v209, 0.0
        %v218 = vmax.f32 %v210, 0.0
        %v219 = vmul.f32 %v207, %v211
        %v220 = vmul.f32 %v208, %v212
        %v221 = vmul.f32 %v209, %v213
        %v222 = vmul.f32 %v210, %v214
        %v223 = vsub.f32 %v215, %v219
        %v224 = vsub.f32 %v216, %v220
        %v225 = vsub.f32 %v217, %v221
        %v226 = vsub.f32 %v218, %v222
        %v227 = vand.u32 2147483647, %v207
        %v228 = vand.u32 2147483647, %v208
        %v229 = vand.u32 2147483647, %v209
        %v230 = vand.u32 2147483647, %v210
        %v231 = vsub.f32 0.0, %v227
        %v232 = vsub.f32 0.0, %v228
        %v233 = vsub.f32 0.0, %v229
        %v234 = vsub.f32 0.0, %v230
        %v235 = vmul.f32 %v231, 1.442695
        %v236 = vpow.pop %v235
        %v237 = vmul.f32 %v232, 1.442695
        %v238 = vpow.pop %v237
        %v239 = vmul.f32 %v233, 1.442695
        %v240 = vpow.pop %v239
        %v241 = vmul.f32 %v234, 1.442695
        %v242 = vpow.pop %v241
        %v243 = vadd.f32 %v236, 1.0
        %v244 = vadd.f32 %v238, 1.0
        %v245 = vadd.f32 %v240, 1.0
        %v246 = vadd.f32 %v242, 1.0
        %v247 = vlog2.pop %v243
        %v248 = vmul.f32 %v247, 0.6931472
        %v249 = vlog2.pop %v244
        %v250 = vmul.f32 %v249, 0.6931472
        %v251 = vlog2.pop %v245
        %v252 = vmul.f32 %v251, 0.6931472
        %v253 = vlog2.pop %v246
        %v254 = vmul.f32 %v253, 0.6931472
        %v255 = vadd.f32 %v223, %v248
        %v256 = vadd.f32 %v224, %v250
        %v257 = vadd.f32 %v225, %v252
        %v258 = vadd.f32 %v226, %v254
        %v259 = vadd.f32 %v255, %v256
        %v260 = vadd.f32 %v259, %v257
        %v261 = vadd.f32 %v260, %v258
        %262 = vadd.xlane.f32.xlu0 %v261
        %v263 = vpop.xlane.xlu0 %262
        %v264 = vrot.slane %v263, 4
        %v265 = vadd.f32 %v263, %v264
        %v266 = vrot.slane %v265, 2
        %v267 = vadd.f32 %v265, %v266
        %v268 = vrot.slane %v267, 1
        %v269 = vadd.f32 %v267, %v268
        %s270 = vtos %v269
        %v271 = vlaneseq
        %v272 = vshrl.u32 %v271, 7
        %v273 = vadd.s32 %v272, 8
        %v274 = vadd.s32 %v272, 16
        %v275 = vadd.s32 %v272, 24
        %vm276 = vcmp.lt.s32.totalorder %v272, 0
        %v277 = vsub.s32 0, %v272
        %v278 = vsel %vm276, %v277, %v272
        %v279 = vshrl.u32 %v278, 5
        %v280 = vand.u32 %v278, 31
        %v281 = vsub.s32 0, %v280
        %v282 = vsel %vm276, %v281, %v280
        %vm283 = vcmp.lt.s32.totalorder %v273, 0
        %v284 = vsub.s32 0, %v273
        %v285 = vsel %vm283, %v284, %v273
        %v286 = vshrl.u32 %v285, 5
        %v287 = vand.u32 %v285, 31
        %v288 = vsub.s32 0, %v287
        %v289 = vsel %vm283, %v288, %v287
        %vm290 = vcmp.lt.s32.totalorder %v274, 0
        %v291 = vsub.s32 0, %v274
        %v292 = vsel %vm290, %v291, %v274
        %v293 = vshrl.u32 %v292, 5
        %v294 = vand.u32 %v292, 31
        %v295 = vsub.s32 0, %v294
        %v296 = vsel %vm290, %v295, %v294
        %vm297 = vcmp.lt.s32.totalorder %v275, 0
        %v298 = vsub.s32 0, %v275
        %v299 = vsel %vm297, %v298, %v275
        %v300 = vshrl.u32 %v299, 5
        %v301 = vand.u32 %v299, 31
        %v302 = vsub.s32 0, %v301
        %v303 = vsel %vm297, %v302, %v301
        %vm304 = vcmp.ne.s32.totalorder %v282, 0
        %vm305 = vcmp.ne.s32.totalorder %v289, 0
        %vm306 = vcmp.ne.s32.totalorder %v296, 0
        %vm307 = vcmp.ne.s32.totalorder %v303, 0
        %vm308 = vcmp.lt.s32.totalorder %v282, 0
        %vm309 = vcmp.lt.s32.totalorder %v289, 0
        %vm310 = vcmp.lt.s32.totalorder %v296, 0
        %vm311 = vcmp.lt.s32.totalorder %v303, 0
        %vm312 = vmand %vm308, %vm304
        %vm313 = vmand %vm309, %vm305
        %vm314 = vmand %vm310, %vm306
        %vm315 = vmand %vm311, %vm307
        %v316 = vadd.s32 %v282, 32
        %v317 = vadd.s32 %v289, 32
        %v318 = vadd.s32 %v296, 32
        %v319 = vadd.s32 %v303, 32
        %v320 = vsel %vm312, %v316, %v282
        %v321 = vsel %vm313, %v317, %v289
        %v322 = vsel %vm314, %v318, %v296
        %v323 = vsel %vm315, %v319, %v303
        %vm324 = vcmp.eq.s32.totalorder %v320, 0
        %vm325 = vcmp.eq.s32.totalorder %v321, 0
        %vm326 = vcmp.eq.s32.totalorder %v322, 0
        %vm327 = vcmp.eq.s32.totalorder %v323, 0
        %vm328 = vcmp.eq.s32.totalorder %v320, 31
        %vm329 = vcmp.eq.s32.totalorder %v321, 31
        %vm330 = vcmp.eq.s32.totalorder %v322, 31
        %vm331 = vcmp.eq.s32.totalorder %v323, 31
        %v332 = vlaneseq
        %v333 = vand.u32 %v332, 127
        %vm334 = vcmp.eq.s32.totalorder %v333, 0
        %vm335 = vcmp.eq.s32.totalorder %v333, 127
        %v336 = vrot.slane %v207, 7
        %v337 = vrot.slane %v208, 7
        %v338 = vrot.slane %v209, 7
        %v339 = vrot.slane %v210, 7
        %vm340 = vcmp.lt.s32.totalorder %v272, 1
        %v341 = vsel %vm340, %v338, %v339
        %v342 = vsel %vm340, %v337, %v338
        %v343 = vsel %vm340, %v336, %v337
        %v344 = vsel %vm340, %v339, %v336
        %v345 = vrot.slane %v207, 1
        %v346 = vrot.slane %v208, 1
        %v347 = vrot.slane %v209, 1
        %v348 = vrot.slane %v210, 1
        %vm349 = vcmp.lt.s32.totalorder %v272, 7
        %v350 = vsel %vm349, %v347, %v348
        %v351 = vsel %vm349, %v346, %v347
        %v352 = vsel %vm349, %v345, %v346
        %v353 = vsel %vm349, %v348, %v345
        %v354 = vsel %vm324, 1, 0
        %v355 = vsel %vm325, 1, 0
        %v356 = vsel %vm326, 1, 0
        %v357 = vsel %vm327, 1, 0
        %vm358 = vcmp.eq.s32.totalorder %v354, 1
        %vm359 = vcmp.eq.s32.totalorder %v355, 1
        %vm360 = vcmp.eq.s32.totalorder %v356, 1
        %vm361 = vcmp.eq.s32.totalorder %v357, 1
        %v362 = vsel %vm358, 0.0, %v344
        %v363 = vsel %vm359, 0.0, %v343
        %v364 = vsel %vm360, 0.0, %v342
        %v365 = vsel %vm361, 0.0, %v341
        %v366 = vadd.f32 %v207, %v362
        %v367 = vadd.f32 %v208, %v363
        %v368 = vadd.f32 %v209, %v364
        %v369 = vadd.f32 %v210, %v365
        %v370 = vsel %vm328, 1, 0
        %v371 = vsel %vm329, 1, 0
        %v372 = vsel %vm330, 1, 0
        %v373 = vsel %vm331, 1, 0
        %vm374 = vcmp.eq.s32.totalorder %v370, 1
        %vm375 = vcmp.eq.s32.totalorder %v371, 1
        %vm376 = vcmp.eq.s32.totalorder %v372, 1
        %vm377 = vcmp.eq.s32.totalorder %v373, 1
        %v378 = vsel %vm374, 0.0, %v352
        %v379 = vsel %vm375, 0.0, %v351
        %v380 = vsel %vm376, 0.0, %v350
        %v381 = vsel %vm377, 0.0, %v353
        %v382 = vadd.f32 %v366, %v378
        %v383 = vadd.f32 %v367, %v379
        %v384 = vadd.f32 %v368, %v380
        %v385 = vadd.f32 %v369, %v381
        %386 = vrot.lane.b32.xlu0 %v382, 1
        %v387 = vpop.permute.xlu0 %386
        %388 = vrot.lane.b32.xlu0 %v383, 1
        %v389 = vpop.permute.xlu0 %388
        %390 = vrot.lane.b32.xlu0 %v384, 1
        %v391 = vpop.permute.xlu0 %390
        %392 = vrot.lane.b32.xlu0 %v385, 1
        %v393 = vpop.permute.xlu0 %392
        %394 = vrot.lane.b32.xlu0 %v382, 127
        %v395 = vpop.permute.xlu0 %394
        %396 = vrot.lane.b32.xlu0 %v383, 127
        %v397 = vpop.permute.xlu0 %396
        %398 = vrot.lane.b32.xlu0 %v384, 127
        %v399 = vpop.permute.xlu0 %398
        %400 = vrot.lane.b32.xlu0 %v385, 127
        %v401 = vpop.permute.xlu0 %400
        %v402 = vsel %vm334, 1, 0
        %vm403 = vcmp.eq.s32.totalorder %v402, 1
        %v404 = vsel %vm403, 0.0, %v387
        %v405 = vsel %vm403, 0.0, %v389
        %v406 = vsel %vm403, 0.0, %v391
        %v407 = vsel %vm403, 0.0, %v393
        %v408 = vadd.f32 %v382, %v404
        %v409 = vadd.f32 %v383, %v405
        %v410 = vadd.f32 %v384, %v406
        %v411 = vadd.f32 %v385, %v407
        %v412 = vsel %vm335, 1, 0
        %vm413 = vcmp.eq.s32.totalorder %v412, 1
        %v414 = vsel %vm413, 0.0, %v395
        %v415 = vsel %vm413, 0.0, %v397
        %v416 = vsel %vm413, 0.0, %v399
        %v417 = vsel %vm413, 0.0, %v401
        %v418 = vadd.f32 %v408, %v414
        %v419 = vadd.f32 %v409, %v415
        %v420 = vadd.f32 %v410, %v416
        %v421 = vadd.f32 %v411, %v417
        %vm422 = vcmp.lt.f32.partialorder %v418, 9.0
        %vm423 = vcmp.lt.f32.partialorder %v419, 9.0
        %vm424 = vcmp.lt.f32.partialorder %v420, 9.0
        %vm425 = vcmp.lt.f32.partialorder %v421, 9.0
        %v426 = vrot.slane %v211, 7
        %v427 = vrot.slane %v212, 7
        %v428 = vrot.slane %v213, 7
        %v429 = vrot.slane %v214, 7
        %v430 = vsel %vm340, %v428, %v429
        %v431 = vsel %vm340, %v427, %v428
        %v432 = vsel %vm340, %v426, %v427
        %v433 = vsel %vm340, %v429, %v426
        %v434 = vrot.slane %v211, 1
        %v435 = vrot.slane %v212, 1
        %v436 = vrot.slane %v213, 1
        %v437 = vrot.slane %v214, 1
        %v438 = vsel %vm349, %v436, %v437
        %v439 = vsel %vm349, %v435, %v436
        %v440 = vsel %vm349, %v434, %v435
        %v441 = vsel %vm349, %v437, %v434
        %v442 = vsel %vm358, 0.0, %v433
        %v443 = vsel %vm359, 0.0, %v432
        %v444 = vsel %vm360, 0.0, %v431
        %v445 = vsel %vm361, 0.0, %v430
        %v446 = vadd.f32 %v211, %v442
        %v447 = vadd.f32 %v212, %v443
        %v448 = vadd.f32 %v213, %v444
        %v449 = vadd.f32 %v214, %v445
        %v450 = vsel %vm374, 0.0, %v440
        %v451 = vsel %vm375, 0.0, %v439
        %v452 = vsel %vm376, 0.0, %v438
        %v453 = vsel %vm377, 0.0, %v441
        %v454 = vadd.f32 %v446, %v450
        %v455 = vadd.f32 %v447, %v451
        %v456 = vadd.f32 %v448, %v452
        %v457 = vadd.f32 %v449, %v453
        %458 = vrot.lane.b32.xlu0 %v454, 1
        %v459 = vpop.permute.xlu0 %458
        %460 = vrot.lane.b32.xlu0 %v455, 1
        %v461 = vpop.permute.xlu0 %460
        %462 = vrot.lane.b32.xlu0 %v456, 1
        %v463 = vpop.permute.xlu0 %462
        %464 = vrot.lane.b32.xlu0 %v457, 1
        %v465 = vpop.permute.xlu0 %464
        %466 = vrot.lane.b32.xlu0 %v454, 127
        %v467 = vpop.permute.xlu0 %466
        %468 = vrot.lane.b32.xlu0 %v455, 127
        %v469 = vpop.permute.xlu0 %468
        %470 = vrot.lane.b32.xlu0 %v456, 127
        %v471 = vpop.permute.xlu0 %470
        %472 = vrot.lane.b32.xlu0 %v457, 127
        %v473 = vpop.permute.xlu0 %472
        %v474 = vsel %vm403, 0.0, %v459
        %v475 = vsel %vm403, 0.0, %v461
        %v476 = vsel %vm403, 0.0, %v463
        %v477 = vsel %vm403, 0.0, %v465
        %v478 = vadd.f32 %v454, %v474
        %v479 = vadd.f32 %v455, %v475
        %v480 = vadd.f32 %v456, %v476
        %v481 = vadd.f32 %v457, %v477
        %v482 = vsel %vm413, 0.0, %v467
        %v483 = vsel %vm413, 0.0, %v469
        %v484 = vsel %vm413, 0.0, %v471
        %v485 = vsel %vm413, 0.0, %v473
        %v486 = vadd.f32 %v478, %v482
        %v487 = vadd.f32 %v479, %v483
        %v488 = vadd.f32 %v480, %v484
        %v489 = vadd.f32 %v481, %v485
        %vm490 = vcmp.lt.f32.partialorder %v486, 9.0
        %vm491 = vcmp.lt.f32.partialorder %v487, 9.0
        %vm492 = vcmp.lt.f32.partialorder %v488, 9.0
        %vm493 = vcmp.lt.f32.partialorder %v489, 9.0
        %v494 = vsel %vm490, 1, 0
        %v495 = vsel %vm491, 1, 0
        %v496 = vsel %vm492, 1, 0
        %v497 = vsel %vm493, 1, 0
        %v498 = vcvt.s32.f32 %v494
        %v499 = vcvt.s32.f32 %v495
        %v500 = vcvt.s32.f32 %v496
        %v501 = vcvt.s32.f32 %v497
        %v502 = vsub.f32 1.3132616, %v498
        %v503 = vsub.f32 1.3132616, %v499
        %v504 = vsub.f32 1.3132616, %v500
        %v505 = vsub.f32 1.3132616, %v501
        %v506 = vsel %vm422, %v502, 0.6931472
        %v507 = vsel %vm423, %v503, 0.6931472
        %v508 = vsel %vm424, %v504, 0.6931472
        %v509 = vsel %vm425, %v505, 0.6931472
        %v510 = vadd.f32 %v506, %v507
        %v511 = vadd.f32 %v510, %v508
        %v512 = vadd.f32 %v511, %v509
        %513 = vadd.xlane.f32.xlu0 %v512
        %v514 = vpop.xlane.xlu0 %513
        %v515 = vrot.slane %v514, 4
        %v516 = vadd.f32 %v514, %v515
        %v517 = vrot.slane %v516, 2
        %v518 = vadd.f32 %v516, %v517
        %v519 = vrot.slane %v518, 1
        %v520 = vadd.f32 %v518, %v519
        %s521 = vtos %v520
        %vm522 = vcmp.eq.s32.totalorder %v333, 1
        %v523 = vstv %s521
        %v524 = vsel %vm522, %v523, 0.0
        %v525 = vstv %s270
        %v526 = vsel %vm334, %v525, %v524
        %527 = vst [vmem:[%s204] sm:$0x1] %v526
        %s528 = sand.u32 %s82, 1
        %s529 = scalar_lea.sflag [#allocation4], %s528
        %s530 = sand.u32 %s82, 1
        %s531 = scalar_lea.vmem [#allocation7], %s530
        // Predicated region
        $region37: #{tpu_custom_call.1} parent=27 // pred_check
          %p532 = pneg %p92
        $region38: #{tpu_custom_call.1} parent=27 // pred_check_branch
          %534 = sbr.rel (%p532) target = $region40
        $region39: #{tpu_custom_call.1} parent=27 // pred_region
          %536 = vsyncadd %s529, 0
          %s537 = scalar_lea.hbm %s2, %s22
          %s539 = sshll.u32 %s531, 4
          %s540 = int_to_ptr.vmem [resolvable:$true] %s539
          %s541 = sshll.u32 %s537, 4
          %s542 = int_to_ptr.hbm [resolvable:$true] %s541
          %544 = dma.vmem_to_hbm [thread:$0]  %s540, 16, %s542, %s529
        $region40: #{tpu_custom_call.1} parent=27 // pred_fallthru
          _
      $region28: #{tpu_custom_call.1} parent=5 // pred_fallthru
        _
      %p545 = scmp.le.s32.totalorder 2, %s17
      // Predicated region
      $region41: #{tpu_custom_call.1} parent=5 // pred_check
        %p546 = pneg %p545
      $region42: #{tpu_custom_call.1} parent=5 // pred_check_branch
        %548 = sbr.rel (%p546) target = $region44
      $region43: #{tpu_custom_call.1} parent=5 // pred_region
        %s549 = ssub.s32 %s17, 2
        // Predicated region
        $region45: #{tpu_custom_call.1} parent=43 // pred_check
          %p550 = pneg %p98
        $region46: #{tpu_custom_call.1} parent=43 // pred_check_branch
          %552 = sbr.rel (%p550) target = $region48
        $region47: #{tpu_custom_call.1} parent=43 // pred_region
          %s553 = sand.u32 %s83, 1
          %s554 = scalar_lea.sflag [#allocation4], %s553
          %s555 = sand.u32 %s83, 1
          %s556 = scalar_lea.vmem [#allocation7], %s555
          %558 = dma.done %s554, 16
        $region48: #{tpu_custom_call.1} parent=43 // pred_fallthru
          _
      $region44: #{tpu_custom_call.1} parent=5 // pred_fallthru
        _
    $region6: #{tpu_custom_call.1} parent=1 // loop_footer
      %s21 = sadd.s32 1, %s17
    $region7: #{tpu_custom_call.1} parent=1 // loop_footer_branch
      %16 = sbr.rel target = $region3
    $region8: #{tpu_custom_call.1} parent=1 // loop_exit
      _
    %559 = vsyncpa [#allocation3], 1
    %s560 = scalar_lea.sflag [#allocation3], 1
    %561 = vsyncpa %s560, 1
    %562 = vsyncpa [#allocation6], 1
    %s563 = scalar_lea.sflag [#allocation6], 1
    %564 = vsyncpa %s563, 1
    %565 = vsyncpa [#allocation4], 1
    %s566 = scalar_lea.sflag [#allocation4], 1
    %567 = vsyncpa %s566, 1

// kernel: tpu_custom_call.1
$region0: #{tpu_custom_call.1}
  #allocation0 [shape = 'u32[]', space=smem, size = 0x4, offset = 0x4, fixed_abs, tag = 'smem constant byte address 0x4 - core index']
  #allocation1 [shape = 'u32[72,128]{1,0:T(1,128)}', space=vmem, size = 0x9000, scoped, tag = 'internal scratch']
  %s0 = inlined_call_operand.hbm [shape: f32[128,128], index: 0, kind: input, shape index: {}]
  %s1 = inlined_call_operand.hbm [shape: f32[128,128], index: 1, kind: input, shape index: {}]
  %s2 = inlined_call_operand.hbm [shape: f32[4,1,128], index: 2, kind: output, shape index: {}]
  %s3 = sld [smem:[#allocation0]]
  $region49: #{tpu_custom_call.1} parent=0
    _
  %s5 = ssub.s32 1, %s3
  %s6 = scalar_select 0, %s5, %s3
  $region1: #{tpu_custom_call.1} parent=0
    #allocation2 [shape = 'u8[32768]{0}', space=vmem, size = 0x8000, scoped, tag = 'input window, operand 0']
    #allocation3 [shape = 's32[2]{0}', space=sflag, size = 0x8, scoped, tag = 'scoped memory for tpu_custom_call.1']
    #allocation4 [shape = 's32[2]{0}', space=sflag, size = 0x8, scoped, tag = 'scoped memory for tpu_custom_call.1']
    #allocation5 [shape = 'u8[32768]{0}', space=vmem, size = 0x8000, scoped, tag = 'input window, operand 1']
    #allocation6 [shape = 's32[2]{0}', space=sflag, size = 0x8, scoped, tag = 'scoped memory for tpu_custom_call.1']
    #allocation7 [shape = 'u8[1024]{0}', space=vmem, size = 0x400, scoped, tag = 'output window, operand 0']
    %7 = vsyncpa [#allocation3], 0
    %s8 = scalar_lea.sflag [#allocation3], 1
    %9 = vsyncpa %s8, 0
    %10 = vsyncpa [#allocation6], 0
    %s11 = scalar_lea.sflag [#allocation6], 1
    %12 = vsyncpa %s11, 0
    %13 = vsyncpa [#allocation4], 0
    %s14 = scalar_lea.sflag [#allocation4], 1
    %15 = vsyncpa %s14, 0
    loop: start=0, step=1, limit=6
    $region2: #{tpu_custom_call.1} parent=1 // loop_pre_header
      _
    $region3: #{tpu_custom_call.1} parent=1 // loop_header
      %s17 = sphi 0, %s21
      %p18 = scmp.ge.s32.totalorder %s17, 6
      %s27 = sphi 0, %s29
      %s30 = sphi 0, %s27
      %s31 = sphi 0, %s30
      %s47 = sphi 0, %s31
      %s53 = sphi 0, %s55
      %s56 = sphi 0, %s53
      %s57 = sphi 0, %s56
      %s73 = sphi 0, %s57
      %s79 = sphi 0, %s81
      %s82 = sphi 0, %s79
      %s83 = sphi 0, %s82
      %s99 = sphi 0, %s83
    $region4: #{tpu_custom_call.1} parent=1 // loop_header_branch
      %20 = sbr.rel (%p18) target = $region8
    $region5: #{tpu_custom_call.1} parent=1 // loop_body
      %s22 = ssub.s32 %s17, 1
      %s23 = ssub.s32 %s17, 2
      %s24 = sadd.s32 %s17, 1
      %s25 = ssub.s32 %s17, %s24
      %p26 = scmp.eq.s32.totalorder %s25, 0
      %s28 = sadd.s32 %s27, 1
      %s29 = scalar_select %p26, %s27, %s28
      %p32 = pneg %p26
      %p33 = scmp.eq.s32.totalorder %s17, 3
      %p34 = por %p32, %p33
      %p35 = scmp.ne.s32.totalorder %s27, %s30
      %p36 = scmp.eq.s32.totalorder %s17, 0
      %p37 = por %p35, %p36
      %p38 = scmp.ne.s32.totalorder %s27, %s30
      %p39 = scmp.eq.s32.totalorder %s22, 3
      %p40 = por %p38, %p39
      %p41 = scmp.ne.s32.totalorder %s30, %s31
      %p42 = scmp.eq.s32.totalorder %s22, 0
      %p43 = por %p41, %p42
      %p44 = scmp.ne.s32.totalorder %s30, %s31
      %p45 = scmp.eq.s32.totalorder %s23, 3
      %p46 = por %p44, %p45
      %p48 = scmp.ne.s32.totalorder %s31, %s47
      %p49 = scmp.eq.s32.totalorder %s23, 0
      %p50 = por %p48, %p49
      %s51 = ssub.s32 %s17, %s24
      %p52 = scmp.eq.s32.totalorder %s51, 0
      %s54 = sadd.s32 %s53, 1
      %s55 = scalar_select %p52, %s53, %s54
      %p58 = pneg %p52
      %p59 = scmp.eq.s32.totalorder %s17, 3
      %p60 = por %p58, %p59
      %p61 = scmp.ne.s32.totalorder %s53, %s56
      %p62 = scmp.eq.s32.totalorder %s17, 0
      %p63 = por %p61, %p62
      %p64 = scmp.ne.s32.totalorder %s53, %s56
      %p65 = scmp.eq.s32.totalorder %s22, 3
      %p66 = por %p64, %p65
      %p67 = scmp.ne.s32.totalorder %s56, %s57
      %p68 = scmp.eq.s32.totalorder %s22, 0
      %p69 = por %p67, %p68
      %p70 = scmp.ne.s32.totalorder %s56, %s57
      %p71 = scmp.eq.s32.totalorder %s23, 3
      %p72 = por %p70, %p71
      %p74 = scmp.ne.s32.totalorder %s57, %s73
      %p75 = scmp.eq.s32.totalorder %s23, 0
      %p76 = por %p74, %p75
      %s77 = ssub.s32 %s17, %s24
      %p78 = scmp.eq.s32.totalorder %s77, 0
      %s80 = sadd.s32 %s79, 1
      %s81 = scalar_select %p78, %s79, %s80
      %p84 = pneg %p78
      %p85 = scmp.eq.s32.totalorder %s17, 3
      %p86 = por %p84, %p85
      %p87 = scmp.ne.s32.totalorder %s79, %s82
      %p88 = scmp.eq.s32.totalorder %s17, 0
      %p89 = por %p87, %p88
      %p90 = scmp.ne.s32.totalorder %s79, %s82
      %p91 = scmp.eq.s32.totalorder %s22, 3
      %p92 = por %p90, %p91
      %p93 = scmp.ne.s32.totalorder %s82, %s83
      %p94 = scmp.eq.s32.totalorder %s22, 0
      %p95 = por %p93, %p94
      %p96 = scmp.ne.s32.totalorder %s82, %s83
      %p97 = scmp.eq.s32.totalorder %s23, 3
      %p98 = por %p96, %p97
      %p100 = scmp.ne.s32.totalorder %s83, %s99
      %p101 = scmp.eq.s32.totalorder %s23, 0
      %p102 = por %p100, %p101
      %p103 = scmp.le.s32.totalorder 1, %s17
      %p104 = scmp.lt.s32.totalorder %s17, 5
      %p105 = pnand %p103, %p104
      %p106 = pneg %p105
      // Predicated region
      $region9: #{tpu_custom_call.1} parent=5 // pred_check
        _
      $region10: #{tpu_custom_call.1} parent=5 // pred_check_branch
        %108 = sbr.rel (%p105) target = $region12
      $region11: #{tpu_custom_call.1} parent=5 // pred_region
        %s109 = ssub.s32 %s17, 1
      $region12: #{tpu_custom_call.1} parent=5 // pred_fallthru
        _
      %p110 = scmp.lt.s32.totalorder %s17, 4
      // Predicated region
      $region13: #{tpu_custom_call.1} parent=5 // pred_check
        %p111 = pneg %p110
      $region14: #{tpu_custom_call.1} parent=5 // pred_check_branch
        %113 = sbr.rel (%p111) target = $region16
      $region15: #{tpu_custom_call.1} parent=5 // pred_region
        // Predicated region
        $region17: #{tpu_custom_call.1} parent=15 // pred_check
          %p114 = pneg %p37
        $region18: #{tpu_custom_call.1} parent=15 // pred_check_branch
          %116 = sbr.rel (%p114) target = $region20
        $region19: #{tpu_custom_call.1} parent=15 // pred_region
          %s117 = sand.u32 %s27, 1
          %s118 = scalar_lea.sflag [#allocation3], %s117
          %s119 = sand.u32 %s27, 1
          %s120 = smul.addr %s119, 32
          %s121 = scalar_lea.vmem [#allocation2], %s120
          %s122 = smul.u32 4, %s17
          %124 = vsyncadd %s118, 0
          %s125 = smul.addr %s122, 8
          %s126 = scalar_lea.hbm %s0, %s125
          %s127 = sshll.u32 %s126, 4
          %s128 = int_to_ptr.hbm [resolvable:$true] %s127
          %s129 = sshll.u32 %s121, 4
          %s130 = int_to_ptr.vmem [resolvable:$true] %s129
          %135 = dma.hbm_to_vmem [thread:$0]  %s128, 512, %s130, %s118, 128, 128, 8
        $region20: #{tpu_custom_call.1} parent=15 // pred_fallthru
          _
        // Predicated region
        $region21: #{tpu_custom_call.1} parent=15 // pred_check
          %p136 = pneg %p63
        $region22: #{tpu_custom_call.1} parent=15 // pred_check_branch
          %138 = sbr.rel (%p136) target = $region24
        $region23: #{tpu_custom_call.1} parent=15 // pred_region
          %s139 = sand.u32 %s53, 1
          %s140 = scalar_lea.sflag [#allocation6], %s139
          %s141 = sand.u32 %s53, 1
          %s142 = smul.addr %s141, 32
          %s143 = scalar_lea.vmem [#allocation5], %s142
          %s144 = smul.u32 4, %s17
          %146 = vsyncadd %s140, 0
          %s147 = smul.addr %s144, 8
          %s148 = scalar_lea.hbm %s1, %s147
          %s149 = sshll.u32 %s148, 4
          %s150 = int_to_ptr.hbm [resolvable:$true] %s149
          %s151 = sshll.u32 %s143, 4
          %s152 = int_to_ptr.vmem [resolvable:$true] %s151
          %157 = dma.hbm_to_vmem [thread:$0]  %s150, 512, %s152, %s140, 128, 128, 8
        $region24: #{tpu_custom_call.1} parent=15 // pred_fallthru
          _
      $region16: #{tpu_custom_call.1} parent=5 // pred_fallthru
        _
      %p158 = scmp.le.s32.totalorder 1, %s17
      %p159 = scmp.lt.s32.totalorder %s17, 5
      %p160 = pnand %p158, %p159
      %p161 = pneg %p160
      // Predicated region
      $region25: #{tpu_custom_call.1} parent=5 // pred_check
        _
      $region26: #{tpu_custom_call.1} parent=5 // pred_check_branch
        %163 = sbr.rel (%p160) target = $region28
      $region27: #{tpu_custom_call.1} parent=5 // pred_region
        %s164 = ssub.s32 %s17, 1
        %s165 = sand.u32 %s30, 1
        %s166 = scalar_lea.sflag [#allocation3], %s165
        %s167 = sand.u32 %s30, 1
        %s168 = smul.addr %s167, 32
        %s169 = scalar_lea.vmem [#allocation2], %s168
        // Predicated region
        $region29: #{tpu_custom_call.1} parent=27 // pred_check
          %p170 = pneg %p43
        $region30: #{tpu_custom_call.1} parent=27 // pred_check_branch
          %172 = sbr.rel (%p170) target = $region32
        $region31: #{tpu_custom_call.1} parent=27 // pred_region
          %174 = dma.done %s166, 512
        $region32: #{tpu_custom_call.1} parent=27 // pred_fallthru
          _
        %s175 = sand.u32 %s56, 1
        %s176 = scalar_lea.sflag [#allocation6], %s175
        %s177 = sand.u32 %s56, 1
        %s178 = smul.addr %s177, 32
        %s179 = scalar_lea.vmem [#allocation5], %s178
        // Predicated region
        $region33: #{tpu_custom_call.1} parent=27 // pred_check
          %p180 = pneg %p69
        $region34: #{tpu_custom_call.1} parent=27 // pred_check_branch
          %182 = sbr.rel (%p180) target = $region36
        $region35: #{tpu_custom_call.1} parent=27 // pred_region
          %184 = dma.done %s176, 512
        $region36: #{tpu_custom_call.1} parent=27 // pred_fallthru
          _
        %s185 = sand.u32 %s30, 1
        %s186 = scalar_lea.sflag [#allocation3], %s185
        %s187 = sand.u32 %s30, 1
        %s188 = smul.addr %s187, 32
        %s189 = scalar_lea.vmem [#allocation2], %s188
        %p190 = pneg %p43
        %p191 = pneg %p40
        %s192 = sand.u32 %s56, 1
        %s193 = scalar_lea.sflag [#allocation6], %s192
        %s194 = sand.u32 %s56, 1
        %s195 = smul.addr %s194, 32
        %s196 = scalar_lea.vmem [#allocation5], %s195
        %p197 = pneg %p69
        %p198 = pneg %p66
        %p199 = pneg %p95
        %p200 = pneg %p92
        %s201 = sand.u32 %s82, 1
        %s202 = scalar_lea.sflag [#allocation4], %s201
        %s203 = sand.u32 %s82, 1
        %s204 = scalar_lea.vmem [#allocation7], %s203
        %s205 = smul.u32 4, %s22
        %s206 = smul.u32 4, %s22
        %v207 = vld [vmem:[%s169] sm:$0xff]
        %v208 = vld [vmem:[%s169 + $0x8] sm:$0xff]
        %v209 = vld [vmem:[%s169 + $0x10] sm:$0xff]
        %v210 = vld [vmem:[%s169 + $0x18] sm:$0xff]
        %v211 = vld [vmem:[%s179] sm:$0xff]
        %v212 = vld [vmem:[%s179 + $0x8] sm:$0xff]
        %v213 = vld [vmem:[%s179 + $0x10] sm:$0xff]
        %v214 = vld [vmem:[%s179 + $0x18] sm:$0xff]
        %v215 = vmax.f32 %v207, 0.0
        %v216 = vmax.f32 %v208, 0.0
        %v217 = vmax.f32 %v209, 0.0
        %v218 = vmax.f32 %v210, 0.0
        %v219 = vmul.f32 %v207, %v211
        %v220 = vmul.f32 %v208, %v212
        %v221 = vmul.f32 %v209, %v213
        %v222 = vmul.f32 %v210, %v214
        %v223 = vsub.f32 %v215, %v219
        %v224 = vsub.f32 %v216, %v220
        %v225 = vsub.f32 %v217, %v221
        %v226 = vsub.f32 %v218, %v222
        %v227 = vand.u32 2147483647, %v207
        %v228 = vand.u32 2147483647, %v208
        %v229 = vand.u32 2147483647, %v209
        %v230 = vand.u32 2147483647, %v210
        %v231 = vsub.f32 0.0, %v227
        %v232 = vsub.f32 0.0, %v228
        %v233 = vsub.f32 0.0, %v229
        %v234 = vsub.f32 0.0, %v230
        %v235 = vmul.f32 %v231, 1.442695
        %v236 = vpow.pop %v235
        %v237 = vmul.f32 %v232, 1.442695
        %v238 = vpow.pop %v237
        %v239 = vmul.f32 %v233, 1.442695
        %v240 = vpow.pop %v239
        %v241 = vmul.f32 %v234, 1.442695
        %v242 = vpow.pop %v241
        %v243 = vadd.f32 %v236, 1.0
        %v244 = vadd.f32 %v238, 1.0
        %v245 = vadd.f32 %v240, 1.0
        %v246 = vadd.f32 %v242, 1.0
        %v247 = vlog2.pop %v243
        %v248 = vmul.f32 %v247, 0.6931472
        %v249 = vlog2.pop %v244
        %v250 = vmul.f32 %v249, 0.6931472
        %v251 = vlog2.pop %v245
        %v252 = vmul.f32 %v251, 0.6931472
        %v253 = vlog2.pop %v246
        %v254 = vmul.f32 %v253, 0.6931472
        %v255 = vadd.f32 %v223, %v248
        %v256 = vadd.f32 %v224, %v250
        %v257 = vadd.f32 %v225, %v252
        %v258 = vadd.f32 %v226, %v254
        %v259 = vadd.f32 %v255, %v256
        %v260 = vadd.f32 %v259, %v257
        %v261 = vadd.f32 %v260, %v258
        %262 = vadd.xlane.f32.xlu0 %v261
        %v263 = vpop.xlane.xlu0 %262
        %v264 = vrot.slane %v263, 4
        %v265 = vadd.f32 %v263, %v264
        %v266 = vrot.slane %v265, 2
        %v267 = vadd.f32 %v265, %v266
        %v268 = vrot.slane %v267, 1
        %v269 = vadd.f32 %v267, %v268
        %s270 = vtos %v269
        %v271 = vlaneseq
        %v272 = vshrl.u32 %v271, 7
        %v273 = vadd.s32 %v272, 8
        %v274 = vadd.s32 %v272, 16
        %v275 = vadd.s32 %v272, 24
        %vm276 = vcmp.lt.s32.totalorder %v272, 0
        %v277 = vsub.s32 0, %v272
        %v278 = vsel %vm276, %v277, %v272
        %v279 = vshrl.u32 %v278, 5
        %v280 = vand.u32 %v278, 31
        %v281 = vsub.s32 0, %v280
        %v282 = vsel %vm276, %v281, %v280
        %vm283 = vcmp.lt.s32.totalorder %v273, 0
        %v284 = vsub.s32 0, %v273
        %v285 = vsel %vm283, %v284, %v273
        %v286 = vshrl.u32 %v285, 5
        %v287 = vand.u32 %v285, 31
        %v288 = vsub.s32 0, %v287
        %v289 = vsel %vm283, %v288, %v287
        %vm290 = vcmp.lt.s32.totalorder %v274, 0
        %v291 = vsub.s32 0, %v274
        %v292 = vsel %vm290, %v291, %v274
        %v293 = vshrl.u32 %v292, 5
        %v294 = vand.u32 %v292, 31
        %v295 = vsub.s32 0, %v294
        %v296 = vsel %vm290, %v295, %v294
        %vm297 = vcmp.lt.s32.totalorder %v275, 0
        %v298 = vsub.s32 0, %v275
        %v299 = vsel %vm297, %v298, %v275
        %v300 = vshrl.u32 %v299, 5
        %v301 = vand.u32 %v299, 31
        %v302 = vsub.s32 0, %v301
        %v303 = vsel %vm297, %v302, %v301
        %vm304 = vcmp.ne.s32.totalorder %v282, 0
        %vm305 = vcmp.ne.s32.totalorder %v289, 0
        %vm306 = vcmp.ne.s32.totalorder %v296, 0
        %vm307 = vcmp.ne.s32.totalorder %v303, 0
        %vm308 = vcmp.lt.s32.totalorder %v282, 0
        %vm309 = vcmp.lt.s32.totalorder %v289, 0
        %vm310 = vcmp.lt.s32.totalorder %v296, 0
        %vm311 = vcmp.lt.s32.totalorder %v303, 0
        %vm312 = vmand %vm308, %vm304
        %vm313 = vmand %vm309, %vm305
        %vm314 = vmand %vm310, %vm306
        %vm315 = vmand %vm311, %vm307
        %v316 = vadd.s32 %v282, 32
        %v317 = vadd.s32 %v289, 32
        %v318 = vadd.s32 %v296, 32
        %v319 = vadd.s32 %v303, 32
        %v320 = vsel %vm312, %v316, %v282
        %v321 = vsel %vm313, %v317, %v289
        %v322 = vsel %vm314, %v318, %v296
        %v323 = vsel %vm315, %v319, %v303
        %vm324 = vcmp.eq.s32.totalorder %v320, 0
        %vm325 = vcmp.eq.s32.totalorder %v321, 0
        %vm326 = vcmp.eq.s32.totalorder %v322, 0
        %vm327 = vcmp.eq.s32.totalorder %v323, 0
        %vm328 = vcmp.eq.s32.totalorder %v320, 31
        %vm329 = vcmp.eq.s32.totalorder %v321, 31
        %vm330 = vcmp.eq.s32.totalorder %v322, 31
        %vm331 = vcmp.eq.s32.totalorder %v323, 31
        %v332 = vlaneseq
        %v333 = vand.u32 %v332, 127
        %vm334 = vcmp.eq.s32.totalorder %v333, 0
        %vm335 = vcmp.eq.s32.totalorder %v333, 127
        %vm340 = vcmask 1040384
        %v341 = vrot.slane %v207, 7
        %v342 = vrot.slane %v208, 7
        %v343 = vsel %vm340, %v341, %v342
        %v344 = vrot.slane %v209, 7
        %v345 = vsel %vm340, %v342, %v344
        %v346 = vrot.slane %v210, 7
        %v347 = vsel %vm340, %v344, %v346
        %v352 = vsel %vm340, 0.0, %v341
        %vm353 = vcmask 1046528
        %v354 = vrot.slane %v207, 1
        %v355 = vrot.slane %v208, 1
        %v356 = vsel %vm353, %v354, %v355
        %v357 = vrot.slane %v209, 1
        %v358 = vsel %vm353, %v355, %v357
        %v359 = vrot.slane %v210, 1
        %v360 = vsel %vm353, %v357, %v359
        %v365 = vsel %vm353, %v359, 0.0
        %v366 = vsel %vm324, 1, 0
        %v367 = vsel %vm325, 1, 0
        %v368 = vsel %vm326, 1, 0
        %v369 = vsel %vm327, 1, 0
        %vm370 = vcmp.eq.s32.totalorder %v366, 1
        %vm371 = vcmp.eq.s32.totalorder %v367, 1
        %vm372 = vcmp.eq.s32.totalorder %v368, 1
        %vm373 = vcmp.eq.s32.totalorder %v369, 1
        %v374 = vsel %vm370, 0.0, %v352
        %v375 = vsel %vm371, 0.0, %v343
        %v376 = vsel %vm372, 0.0, %v345
        %v377 = vsel %vm373, 0.0, %v347
        %v378 = vadd.f32 %v207, %v374
        %v379 = vadd.f32 %v208, %v375
        %v380 = vadd.f32 %v209, %v376
        %v381 = vadd.f32 %v210, %v377
        %v382 = vsel %vm328, 1, 0
        %v383 = vsel %vm329, 1, 0
        %v384 = vsel %vm330, 1, 0
        %v385 = vsel %vm331, 1, 0
        %vm386 = vcmp.eq.s32.totalorder %v382, 1
        %vm387 = vcmp.eq.s32.totalorder %v383, 1
        %vm388 = vcmp.eq.s32.totalorder %v384, 1
        %vm389 = vcmp.eq.s32.totalorder %v385, 1
        %v390 = vsel %vm386, 0.0, %v356
        %v391 = vsel %vm387, 0.0, %v358
        %v392 = vsel %vm388, 0.0, %v360
        %v393 = vsel %vm389, 0.0, %v365
        %v394 = vadd.f32 %v378, %v390
        %v395 = vadd.f32 %v379, %v391
        %v396 = vadd.f32 %v380, %v392
        %v397 = vadd.f32 %v381, %v393
        %402 = vrot.lane.b32.xlu0 %v394, 1
        %v403 = vpop.permute.xlu0 %402
        %404 = vrot.lane.b32.xlu0 %v395, 1
        %v405 = vpop.permute.xlu0 %404
        %406 = vrot.lane.b32.xlu0 %v396, 1
        %v407 = vpop.permute.xlu0 %406
        %408 = vrot.lane.b32.xlu0 %v397, 1
        %v409 = vpop.permute.xlu0 %408
        %vm414 = vcmask 7168
        %v415 = vsel %vm414, 0.0, %v403
        %v416 = vsel %vm414, 0.0, %v405
        %v417 = vsel %vm414, 0.0, %v407
        %v418 = vsel %vm414, 0.0, %v409
        %419 = vrot.lane.b32.xlu0 %v394, 127
        %v420 = vpop.permute.xlu0 %419
        %421 = vrot.lane.b32.xlu0 %v395, 127
        %v422 = vpop.permute.xlu0 %421
        %423 = vrot.lane.b32.xlu0 %v396, 127
        %v424 = vpop.permute.xlu0 %423
        %425 = vrot.lane.b32.xlu0 %v397, 127
        %v426 = vpop.permute.xlu0 %425
        %vm431 = vcmask 1039360
        %v432 = vsel %vm431, %v420, 0.0
        %v433 = vsel %vm431, %v422, 0.0
        %v434 = vsel %vm431, %v424, 0.0
        %v435 = vsel %vm431, %v426, 0.0
        %v436 = vsel %vm334, 1, 0
        %vm437 = vcmp.eq.s32.totalorder %v436, 1
        %v438 = vsel %vm437, 0.0, %v415
        %v439 = vsel %vm437, 0.0, %v416
        %v440 = vsel %vm437, 0.0, %v417
        %v441 = vsel %vm437, 0.0, %v418
        %v442 = vadd.f32 %v394, %v438
        %v443 = vadd.f32 %v395, %v439
        %v444 = vadd.f32 %v396, %v440
        %v445 = vadd.f32 %v397, %v441
        %v446 = vsel %vm335, 1, 0
        %vm447 = vcmp.eq.s32.totalorder %v446, 1
        %v448 = vsel %vm447, 0.0, %v432
        %v449 = vsel %vm447, 0.0, %v433
        %v450 = vsel %vm447, 0.0, %v434
        %v451 = vsel %vm447, 0.0, %v435
        %v452 = vadd.f32 %v442, %v448
        %v453 = vadd.f32 %v443, %v449
        %v454 = vadd.f32 %v444, %v450
        %v455 = vadd.f32 %v445, %v451
        %vm456 = vcmp.lt.f32.partialorder %v452, 9.0
        %vm457 = vcmp.lt.f32.partialorder %v453, 9.0
        %vm458 = vcmp.lt.f32.partialorder %v454, 9.0
        %vm459 = vcmp.lt.f32.partialorder %v455, 9.0
        %v464 = vrot.slane %v211, 7
        %v465 = vrot.slane %v212, 7
        %v466 = vsel %vm340, %v464, %v465
        %v467 = vrot.slane %v213, 7
        %v468 = vsel %vm340, %v465, %v467
        %v469 = vrot.slane %v214, 7
        %v470 = vsel %vm340, %v467, %v469
        %v475 = vsel %vm340, 0.0, %v464
        %v476 = vrot.slane %v211, 1
        %v477 = vrot.slane %v212, 1
        %v478 = vsel %vm353, %v476, %v477
        %v479 = vrot.slane %v213, 1
        %v480 = vsel %vm353, %v477, %v479
        %v481 = vrot.slane %v214, 1
        %v482 = vsel %vm353, %v479, %v481
        %v487 = vsel %vm353, %v481, 0.0
        %v488 = vsel %vm370, 0.0, %v475
        %v489 = vsel %vm371, 0.0, %v466
        %v490 = vsel %vm372, 0.0, %v468
        %v491 = vsel %vm373, 0.0, %v470
        %v492 = vadd.f32 %v211, %v488
        %v493 = vadd.f32 %v212, %v489
        %v494 = vadd.f32 %v213, %v490
        %v495 = vadd.f32 %v214, %v491
        %v496 = vsel %vm386, 0.0, %v478
        %v497 = vsel %vm387, 0.0, %v480
        %v498 = vsel %vm388, 0.0, %v482
        %v499 = vsel %vm389, 0.0, %v487
        %v500 = vadd.f32 %v492, %v496
        %v501 = vadd.f32 %v493, %v497
        %v502 = vadd.f32 %v494, %v498
        %v503 = vadd.f32 %v495, %v499
        %508 = vrot.lane.b32.xlu0 %v500, 1
        %v509 = vpop.permute.xlu0 %508
        %510 = vrot.lane.b32.xlu0 %v501, 1
        %v511 = vpop.permute.xlu0 %510
        %512 = vrot.lane.b32.xlu0 %v502, 1
        %v513 = vpop.permute.xlu0 %512
        %514 = vrot.lane.b32.xlu0 %v503, 1
        %v515 = vpop.permute.xlu0 %514
        %v520 = vsel %vm414, 0.0, %v509
        %v521 = vsel %vm414, 0.0, %v511
        %v522 = vsel %vm414, 0.0, %v513
        %v523 = vsel %vm414, 0.0, %v515
        %524 = vrot.lane.b32.xlu0 %v500, 127
        %v525 = vpop.permute.xlu0 %524
        %526 = vrot.lane.b32.xlu0 %v501, 127
        %v527 = vpop.permute.xlu0 %526
        %528 = vrot.lane.b32.xlu0 %v502, 127
        %v529 = vpop.permute.xlu0 %528
        %530 = vrot.lane.b32.xlu0 %v503, 127
        %v531 = vpop.permute.xlu0 %530
        %v536 = vsel %vm431, %v525, 0.0
        %v537 = vsel %vm431, %v527, 0.0
        %v538 = vsel %vm431, %v529, 0.0
        %v539 = vsel %vm431, %v531, 0.0
        %v540 = vsel %vm437, 0.0, %v520
        %v541 = vsel %vm437, 0.0, %v521
        %v542 = vsel %vm437, 0.0, %v522
        %v543 = vsel %vm437, 0.0, %v523
        %v544 = vadd.f32 %v500, %v540
        %v545 = vadd.f32 %v501, %v541
        %v546 = vadd.f32 %v502, %v542
        %v547 = vadd.f32 %v503, %v543
        %v548 = vsel %vm447, 0.0, %v536
        %v549 = vsel %vm447, 0.0, %v537
        %v550 = vsel %vm447, 0.0, %v538
        %v551 = vsel %vm447, 0.0, %v539
        %v552 = vadd.f32 %v544, %v548
        %v553 = vadd.f32 %v545, %v549
        %v554 = vadd.f32 %v546, %v550
        %v555 = vadd.f32 %v547, %v551
        %vm556 = vcmp.lt.f32.partialorder %v552, 9.0
        %vm557 = vcmp.lt.f32.partialorder %v553, 9.0
        %vm558 = vcmp.lt.f32.partialorder %v554, 9.0
        %vm559 = vcmp.lt.f32.partialorder %v555, 9.0
        %v560 = vsel %vm556, 1, 0
        %v561 = vsel %vm557, 1, 0
        %v562 = vsel %vm558, 1, 0
        %v563 = vsel %vm559, 1, 0
        %v564 = vcvt.s32.f32 %v560
        %v565 = vcvt.s32.f32 %v561
        %v566 = vcvt.s32.f32 %v562
        %v567 = vcvt.s32.f32 %v563
        %v568 = vsub.f32 1.3132616, %v564
        %v569 = vsub.f32 1.3132616, %v565
        %v570 = vsub.f32 1.3132616, %v566
        %v571 = vsub.f32 1.3132616, %v567
        %v572 = vsel %vm456, %v568, 0.6931472
        %v573 = vsel %vm457, %v569, 0.6931472
        %v574 = vsel %vm458, %v570, 0.6931472
        %v575 = vsel %vm459, %v571, 0.6931472
        %v576 = vadd.f32 %v572, %v573
        %v577 = vadd.f32 %v576, %v574
        %v578 = vadd.f32 %v577, %v575
        %579 = vadd.xlane.f32.xlu0 %v578
        %v580 = vpop.xlane.xlu0 %579
        %v581 = vrot.slane %v580, 4
        %v582 = vadd.f32 %v580, %v581
        %v583 = vrot.slane %v582, 2
        %v584 = vadd.f32 %v582, %v583
        %v585 = vrot.slane %v584, 1
        %v586 = vadd.f32 %v584, %v585
        %s587 = vtos %v586
        %vm588 = vcmp.eq.s32.totalorder %v333, 1
        %v589 = vstv %s587
        %v590 = vsel %vm588, %v589, 0.0
        %v591 = vstv %s270
        %v592 = vsel %vm334, %v591, %v590
        %593 = vst [vmem:[%s204] sm:$0x1] %v592
        %s594 = sand.u32 %s82, 1
        %s595 = scalar_lea.sflag [#allocation4], %s594
        %s596 = sand.u32 %s82, 1
        %s597 = scalar_lea.vmem [#allocation7], %s596
        // Predicated region
        $region37: #{tpu_custom_call.1} parent=27 // pred_check
          %p598 = pneg %p92
        $region38: #{tpu_custom_call.1} parent=27 // pred_check_branch
          %600 = sbr.rel (%p598) target = $region40
        $region39: #{tpu_custom_call.1} parent=27 // pred_region
          %602 = vsyncadd %s595, 0
          %s603 = scalar_lea.hbm %s2, %s22
          %s605 = sshll.u32 %s597, 4
          %s606 = int_to_ptr.vmem [resolvable:$true] %s605
          %s607 = sshll.u32 %s603, 4
          %s608 = int_to_ptr.hbm [resolvable:$true] %s607
          %610 = dma.vmem_to_hbm [thread:$0]  %s606, 16, %s608, %s595
        $region40: #{tpu_custom_call.1} parent=27 // pred_fallthru
          _
      $region28: #{tpu_custom_call.1} parent=5 // pred_fallthru
        _
      %p611 = scmp.le.s32.totalorder 2, %s17
      // Predicated region
      $region41: #{tpu_custom_call.1} parent=5 // pred_check
        %p612 = pneg %p611
      $region42: #{tpu_custom_call.1} parent=5 // pred_check_branch
        %614 = sbr.rel (%p612) target = $region44
      $region43: #{tpu_custom_call.1} parent=5 // pred_region
        %s615 = ssub.s32 %s17, 2
        // Predicated region
        $region45: #{tpu_custom_call.1} parent=43 // pred_check
          %p616 = pneg %p98
        $region46: #{tpu_custom_call.1} parent=43 // pred_check_branch
          %618 = sbr.rel (%p616) target = $region48
        $region47: #{tpu_custom_call.1} parent=43 // pred_region
          %s619 = sand.u32 %s83, 1
          %s620 = scalar_lea.sflag [#allocation4], %s619
          %s621 = sand.u32 %s83, 1
          %s622 = scalar_lea.vmem [#allocation7], %s621
          %624 = dma.done %s620, 16
        $region48: #{tpu_custom_call.1} parent=43 // pred_fallthru
          _
      $region44: #{tpu_custom_call.1} parent=5 // pred_fallthru
        _
    $region6: #{tpu_custom_call.1} parent=1 // loop_footer
      %s21 = sadd.s32 1, %s17
    $region7: #{tpu_custom_call.1} parent=1 // loop_footer_branch
      %16 = sbr.rel target = $region3
    $region8: #{tpu_custom_call.1} parent=1 // loop_exit
      _
    %625 = vsyncpa [#allocation3], 1
    %s626 = scalar_lea.sflag [#allocation3], 1
    %627 = vsyncpa %s626, 1
    %628 = vsyncpa [#allocation6], 1
    %s629 = scalar_lea.sflag [#allocation6], 1
    %630 = vsyncpa %s629, 1
    %631 = vsyncpa [#allocation4], 1
    %s632 = scalar_lea.sflag [#allocation4], 1
    %633 = vsyncpa %s632, 1

</llo_original>
